<compile_context>
chip_gen: v5e
topology: v5e:2x2
jax: 0.10.0
libtpu: 0.0.40
codegen_flags: <defaults>
</compile_context>

<pallas_src>
import jax
import jax.numpy as jnp
from jax import lax
from jax.experimental import pallas as pl
from jax.experimental.pallas import tpu as pltpu


def _nca_kernel(x_ref, w1_ref, b1_ref, wl1_ref, wl2_ref, w2_ref, b2_ref,
                o_ref, pad_ref):
    # x_ref:  (1, H*W, Cin)
    # w1_ref: (Cin, Cout)      1x1 conv weight, BN1 scale folded in
    # b1_ref: (1, Cout)        folded BN1 bias
    # wl1_ref: (Cout, Cout//4), wl2_ref: (Cout//4, Cout)   SE gate linears
    # w2_ref: (9*Cout, Cout)   3x3 conv weight, tap-major K, BN2 scale folded
    # b2_ref: (1, Cout)        folded BN2 bias
    # o_ref:  (1, H, W, Cout)
    # pad_ref: (H+2, W+2, Cout) f32 VMEM scratch (zero-padded copy of y)
    H = pad_ref.shape[0] - 2
    W = pad_ref.shape[1] - 2
    Cout = o_ref.shape[3]

    # ---- 1x1 conv (scale-folded) + bias + ReLU ------------------------------
    x1 = jnp.dot(x_ref[0], w1_ref[...], preferred_element_type=jnp.float32)
    x1 = jnp.maximum(x1 + b1_ref[...], 0.0)                  # (H*W, Cout) f32

    # ---- squeeze/excite gate: avg-pool -> Lin+ReLU -> Lin+Sigmoid -----------
    pooled = jnp.mean(x1, axis=0, keepdims=True)             # (1, Cout)
    h1 = jnp.maximum(
        jnp.dot(pooled.astype(wl1_ref.dtype), wl1_ref[...],
                preferred_element_type=jnp.float32), 0.0)
    att = jax.nn.sigmoid(
        jnp.dot(h1.astype(wl2_ref.dtype), wl2_ref[...],
                preferred_element_type=jnp.float32))
    y = x1 * att                                             # (H*W, Cout) f32

    # ---- zero-padded copy of y; each scratch element written exactly once ---
    y3 = y.reshape(H, W, Cout)
    zcol = jnp.zeros((H, 1, Cout), jnp.float32)
    zrow = jnp.zeros((W + 2, Cout), jnp.float32)
    pad_ref[1:H + 1, :, :] = jnp.concatenate([zcol, y3, zcol], axis=1)
    pad_ref[0] = zrow
    pad_ref[H + 1] = zrow

    # ---- 3x3 conv (scale-folded) as ONE (H*W, 9*Cout)x(9*Cout, Cout) matmul -
    taps = jnp.concatenate(
        [pad_ref[ky:ky + H, kx:kx + W, :].reshape(H * W, Cout)
         for ky in range(3) for kx in range(3)], axis=-1)    # (H*W, 9*Cout)
    z = jnp.dot(taps.astype(w2_ref.dtype), w2_ref[...],
                preferred_element_type=jnp.float32)
    z = z + b2_ref[...]

    # ---- residual + ReLU -----------------------------------------------------
    o_ref[0] = jnp.maximum(y + z, 0.0).reshape(H, W, Cout)


def new_channel_attention_nhwc(x_nhwc, params, *, mxu_dtype=jnp.float32,
                               vmem_limit_bytes=None):
    """NHWC entry point: (N, H, W, Cin) -> (N, H, W, Cout). No layout transposes."""
    w1, b1, wl1, wl2, w2, b2 = params
    N, H, W, Cin = x_nhwc.shape
    Cout = w1.shape[1]
    Cred = wl1.shape[1]

    x_flat = x_nhwc.reshape(N, H * W, Cin).astype(mxu_dtype)
    w1 = w1.astype(mxu_dtype)
    wl1 = wl1.astype(mxu_dtype)
    wl2 = wl2.astype(mxu_dtype)
    w2 = w2.astype(mxu_dtype)
    b1 = b1.astype(jnp.float32)
    b2 = b2.astype(jnp.float32)

    if vmem_limit_bytes is None:
        isz = jnp.dtype(mxu_dtype).itemsize
        blocks = 2 * (H * W * Cin * isz + H * W * Cout * 4)   # double-buffered io
        weights = isz * (Cin * Cout + Cout * Cred + Cred * Cout
                         + 9 * Cout * Cout) + 4 * 2 * Cout
        scratch = 4 * (H + 2) * (W + 2) * Cout
        vmem_limit_bytes = int(min(max(2 * (blocks + weights + scratch),
                                       8 << 20), 96 << 20))

    out = pl.pallas_call(
        _nca_kernel,
        out_shape=jax.ShapeDtypeStruct((N, H, W, Cout), jnp.float32),
        grid_spec=pltpu.PrefetchScalarGridSpec(
            num_scalar_prefetch=0,
            grid=(N,),
            in_specs=[
                pl.BlockSpec((1, H * W, Cin), lambda b: (b, 0, 0)),
                pl.BlockSpec((Cin, Cout), lambda b: (0, 0)),
                pl.BlockSpec((1, Cout), lambda b: (0, 0)),
                pl.BlockSpec((Cout, Cred), lambda b: (0, 0)),
                pl.BlockSpec((Cred, Cout), lambda b: (0, 0)),
                pl.BlockSpec((9 * Cout, Cout), lambda b: (0, 0)),
                pl.BlockSpec((1, Cout), lambda b: (0, 0)),
            ],
            out_specs=pl.BlockSpec((1, H, W, Cout), lambda b: (b, 0, 0, 0)),
            scratch_shapes=[pltpu.VMEM((H + 2, W + 2, Cout), jnp.float32)],
        ),
        compiler_params=pltpu.CompilerParams(
            dimension_semantics=("parallel",),
            vmem_limit_bytes=vmem_limit_bytes),
    )(x_flat, w1, b1, wl1, wl2, w2, b2)
    return out


def new_channel_attention(x_nchw, params, **kwargs):
    """PyTorch-parity wrapper (NCHW in / NCHW out).

    Prefer new_channel_attention_nhwc in real pipelines: each transpose here is
    an extra full HBM read+write pass by XLA.
    """
    x_nhwc = jnp.transpose(x_nchw, (0, 2, 3, 1))
    out_nhwc = new_channel_attention_nhwc(x_nhwc, params, **kwargs)
    return jnp.transpose(out_nhwc, (0, 3, 1, 2))


def init_params(key, in_channel, out_channel, eps=1e-5):
    """Deterministic params mirroring the PyTorch module's shapes.

    Inference-mode BatchNorm is folded: scales go into the conv weights,
    the remainder becomes a per-channel bias.
    """
    cr = out_channel // 4
    ks = jax.random.split(key, 12)

    # conv1 1x1: torch weight (Cout, Cin, 1, 1) -> kernel form (Cin, Cout)
    w1_oihw = 0.1 * jax.random.normal(ks[0], (out_channel, in_channel, 1, 1),
                                      jnp.float32)
    w1 = jnp.transpose(w1_oihw[:, :, 0, 0], (1, 0))

    # BN1 fold
    g1 = 1.0 + 0.1 * jax.random.normal(ks[1], (out_channel,), jnp.float32)
    b1 = 0.1 * jax.random.normal(ks[2], (out_channel,), jnp.float32)
    m1 = 0.1 * jax.random.normal(ks[3], (out_channel,), jnp.float32)
    v1 = 1.0 + 0.1 * jnp.abs(jax.random.normal(ks[4], (out_channel,), jnp.float32))
    s1 = g1 / jnp.sqrt(v1 + eps)
    w1f = w1 * s1[None, :]
    bias1 = (b1 - m1 * s1)[None, :]                         # (1, Cout)

    # linears: torch weight (out_f, in_f) -> kernel form (in_f, out_f)
    wl1 = jnp.transpose(
        0.1 * jax.random.normal(ks[5], (cr, out_channel), jnp.float32))
    wl2 = jnp.transpose(
        0.1 * jax.random.normal(ks[6], (out_channel, cr), jnp.float32))

    # conv2 3x3: torch weight (Cout, Cin=Cout, 3, 3) -> tap-major K (9*Cout, Cout)
    w2_oihw = 0.1 * jax.random.normal(ks[7], (out_channel, out_channel, 3, 3),
                                      jnp.float32)
    w2 = jnp.transpose(w2_oihw, (2, 3, 1, 0)).reshape(9 * out_channel,
                                                      out_channel)

    # BN2 fold
    g2 = 1.0 + 0.1 * jax.random.normal(ks[8], (out_channel,), jnp.float32)
    b2 = 0.1 * jax.random.normal(ks[9], (out_channel,), jnp.float32)
    m2 = 0.1 * jax.random.normal(ks[10], (out_channel,), jnp.float32)
    v2 = 1.0 + 0.1 * jnp.abs(jax.random.normal(ks[11], (out_channel,), jnp.float32))
    s2 = g2 / jnp.sqrt(v2 + eps)
    w2f = w2 * s2[None, :]
    bias2 = (b2 - m2 * s2)[None, :]                         # (1, Cout)

    return (w1f, bias1, wl1, wl2, w2f, bias2)


def reference(x_nchw, params):
    """Pure-JAX reference of the same forward pass (for correctness check)."""
    w1, b1, wl1, wl2, w2, b2 = params
    Cout = w1.shape[1]
    x1 = jnp.einsum('nihw,io->nohw', x_nchw, w1)
    x1 = jnp.maximum(x1 + b1[0][None, :, None, None], 0.0)
    pooled = jnp.mean(x1, axis=(2, 3))
    att = jax.nn.sigmoid(jnp.maximum(pooled @ wl1, 0.0) @ wl2)
    y = x1 * att[:, :, None, None]
    w2_oihw = jnp.transpose(w2.reshape(3, 3, Cout, Cout), (3, 2, 0, 1))
    z = lax.conv_general_dilated(y, w2_oihw, (1, 1), 'SAME',
                                 dimension_numbers=('NCHW', 'OIHW', 'NCHW'))
    z = z + b2[0][None, :, None, None]
    return jnp.maximum(y + z, 0.0)


if __name__ == "__main__":
    key = jax.random.PRNGKey(0)
    kx, kp = jax.random.split(key)

    N, Cin, Cout, H, W = 2, 4, 32, 16, 16
    x = jax.random.normal(kx, (N, Cin, H, W), jnp.float32)
    params = init_params(kp, Cin, Cout)

    out = jax.block_until_ready(new_channel_attention(x, params))
    ref = jax.block_until_ready(reference(x, params))

    assert out.shape == (N, Cout, H, W)
    err = jnp.max(jnp.abs(out - ref))
    assert jnp.allclose(out, ref, rtol=1e-4, atol=1e-4), f"max abs err {err}"

    print("KERNEL_OK")
</pallas_src>

<mosaic_0001>
module attributes {stable_mosaic.version = 11 : i64} {
  func.func @_nca_kernel(%arg0: i32, %arg1: memref<1x256x4xf32, #tpu.memory_space<vmem>>, %arg2: memref<4x32xf32, #tpu.memory_space<vmem>>, %arg3: memref<1x32xf32, #tpu.memory_space<vmem>>, %arg4: memref<32x8xf32, #tpu.memory_space<vmem>>, %arg5: memref<8x32xf32, #tpu.memory_space<vmem>>, %arg6: memref<288x32xf32, #tpu.memory_space<vmem>>, %arg7: memref<1x32xf32, #tpu.memory_space<vmem>>, %arg8: memref<1x16x16x32xf32, #tpu.memory_space<vmem>>, %arg9: memref<18x18x32xf32, #tpu.memory_space<vmem>>) attributes {dimension_semantics = [#tpu.dimension_semantics<parallel>], iteration_bounds = array<i64: 2>, scalar_prefetch = 0 : i64, scratch_operands = 1 : i64, tpu.core_type = #tpu.core_type<tc>, window_params = [{transform_indices = @transform_0, window_bounds = array<i64: 1, 256, 4>}, {pipeline_mode = #tpu.pipeline_mode<synchronous>, transform_indices = @transform_1, window_bounds = array<i64: 4, 32>}, {pipeline_mode = #tpu.pipeline_mode<synchronous>, transform_indices = @transform_2, window_bounds = array<i64: 1, 32>}, {pipeline_mode = #tpu.pipeline_mode<synchronous>, transform_indices = @transform_3, window_bounds = array<i64: 32, 8>}, {pipeline_mode = #tpu.pipeline_mode<synchronous>, transform_indices = @transform_4, window_bounds = array<i64: 8, 32>}, {pipeline_mode = #tpu.pipeline_mode<synchronous>, transform_indices = @transform_5, window_bounds = array<i64: 288, 32>}, {pipeline_mode = #tpu.pipeline_mode<synchronous>, transform_indices = @transform_6, window_bounds = array<i64: 1, 32>}, {transform_indices = @transform_7, window_bounds = array<i64: 1, 16, 16, 32>}]} {
    %c0 = arith.constant 0 : index
    %c0_0 = arith.constant 0 : index
    %c0_1 = arith.constant 0 : index
    %0 = vector.load %arg1[%c0, %c0_0, %c0_1] : memref<1x256x4xf32, #tpu.memory_space<vmem>>, vector<1x256x4xf32>
    %1 = vector.shape_cast %0 : vector<1x256x4xf32> to vector<256x4xf32>
    %c0_2 = arith.constant 0 : index
    %c0_3 = arith.constant 0 : index
    %2 = vector.load %arg2[%c0_2, %c0_3] : memref<4x32xf32, #tpu.memory_space<vmem>>, vector<4x32xf32>
    %cst = arith.constant dense<0.000000e+00> : vector<256x32xf32>
    %3 = tpu.matmul %1, %2, %cst {dimension_numbers = #tpu.dot_dimension_numbers<[1], [0], [0], [1], [0, 0, 1, 1], [], []>} : vector<256x4xf32>, vector<4x32xf32>, vector<256x32xf32> -> vector<256x32xf32>
    %c0_4 = arith.constant 0 : index
    %c0_5 = arith.constant 0 : index
    %4 = vector.load %arg3[%c0_4, %c0_5] : memref<1x32xf32, #tpu.memory_space<vmem>>, vector<1x32xf32>
    %5 = vector.broadcast %4 : vector<1x32xf32> to vector<256x32xf32>
    %6 = arith.addf %3, %5 : vector<256x32xf32>
    %cst_6 = arith.constant 0.000000e+00 : f32
    %7 = vector.broadcast %cst_6 : f32 to vector<256x32xf32>
    %8 = arith.maximumf %6, %7 : vector<256x32xf32>
    %cst_7 = arith.constant dense<0.000000e+00> : vector<32xf32>
    %9 = vector.multi_reduction <add>, %8, %cst_7 [0] : vector<256x32xf32> to vector<32xf32>
    %10 = vector.shape_cast %9 : vector<32xf32> to vector<1x32xf32>
    %cst_8 = arith.constant 2.560000e+02 : f32
    %11 = vector.broadcast %cst_8 : f32 to vector<1x32xf32>
    %12 = arith.divf %10, %11 : vector<1x32xf32>
    %c0_9 = arith.constant 0 : index
    %c0_10 = arith.constant 0 : index
    %13 = vector.load %arg4[%c0_9, %c0_10] : memref<32x8xf32, #tpu.memory_space<vmem>>, vector<32x8xf32>
    %cst_11 = arith.constant dense<0.000000e+00> : vector<1x8xf32>
    %14 = tpu.matmul %12, %13, %cst_11 {dimension_numbers = #tpu.dot_dimension_numbers<[1], [0], [0], [1], [0, 0, 1, 1], [], []>} : vector<1x32xf32>, vector<32x8xf32>, vector<1x8xf32> -> vector<1x8xf32>
    %cst_12 = arith.constant 0.000000e+00 : f32
    %15 = vector.broadcast %cst_12 : f32 to vector<1x8xf32>
    %16 = arith.maximumf %14, %15 : vector<1x8xf32>
    %c0_13 = arith.constant 0 : index
    %c0_14 = arith.constant 0 : index
    %17 = vector.load %arg5[%c0_13, %c0_14] : memref<8x32xf32, #tpu.memory_space<vmem>>, vector<8x32xf32>
    %cst_15 = arith.constant dense<0.000000e+00> : vector<1x32xf32>
    %18 = tpu.matmul %16, %17, %cst_15 {dimension_numbers = #tpu.dot_dimension_numbers<[1], [0], [0], [1], [0, 0, 1, 1], [], []>} : vector<1x8xf32>, vector<8x32xf32>, vector<1x32xf32> -> vector<1x32xf32>
    %19 = arith.negf %18 : vector<1x32xf32>
    %20 = math.exp %19 : vector<1x32xf32>
    %cst_16 = arith.constant 1.000000e+00 : f32
    %21 = vector.broadcast %cst_16 : f32 to vector<1x32xf32>
    %22 = arith.addf %21, %20 : vector<1x32xf32>
    %23 = arith.divf %21, %22 : vector<1x32xf32>
    %24 = vector.broadcast %23 : vector<1x32xf32> to vector<256x32xf32>
    %25 = arith.mulf %8, %24 : vector<256x32xf32>
    %26 = vector.shape_cast %25 : vector<256x32xf32> to vector<16x16x32xf32>
    %cst_17 = arith.constant 0.000000e+00 : f32
    %27 = vector.broadcast %cst_17 : f32 to vector<16x1x32xf32>
    %cst_18 = arith.constant 0.000000e+00 : f32
    %28 = vector.broadcast %cst_18 : f32 to vector<18x32xf32>
    %29 = tpu.concatenate %27, %26, %27 in 1 : vector<16x1x32xf32>, vector<16x16x32xf32>, vector<16x1x32xf32> -> vector<16x18x32xf32>
    %c1 = arith.constant 1 : index
    %c0_19 = arith.constant 0 : index
    %c0_20 = arith.constant 0 : index
    %30 = vector.load %arg9[%c1, %c0_19, %c0_20] : memref<18x18x32xf32, #tpu.memory_space<vmem>>, vector<16x18x32xf32>
    tpu.vector_store %arg9[%c1, %c0_19, %c0_20], %29 {strides = array<i32>} : memref<18x18x32xf32, #tpu.memory_space<vmem>>, vector<16x18x32xf32>,
    %c0_21 = arith.constant 0 : index
    %c0_22 = arith.constant 0 : index
    %c0_23 = arith.constant 0 : index
    %31 = vector.load %arg9[%c0_21, %c0_22, %c0_23] : memref<18x18x32xf32, #tpu.memory_space<vmem>>, vector<1x18x32xf32>
    %32 = vector.shape_cast %31 : vector<1x18x32xf32> to vector<18x32xf32>
    %33 = vector.shape_cast %28 : vector<18x32xf32> to vector<1x18x32xf32>
    tpu.vector_store %arg9[%c0_21, %c0_22, %c0_23], %33 {strides = array<i32>} : memref<18x18x32xf32, #tpu.memory_space<vmem>>, vector<1x18x32xf32>,
    %c17 = arith.constant 17 : index
    %c0_24 = arith.constant 0 : index
    %c0_25 = arith.constant 0 : index
    %34 = vector.load %arg9[%c17, %c0_24, %c0_25] : memref<18x18x32xf32, #tpu.memory_space<vmem>>, vector<1x18x32xf32>
    %35 = vector.shape_cast %34 : vector<1x18x32xf32> to vector<18x32xf32>
    %36 = vector.shape_cast %28 : vector<18x32xf32> to vector<1x18x32xf32>
    tpu.vector_store %arg9[%c17, %c0_24, %c0_25], %36 {strides = array<i32>} : memref<18x18x32xf32, #tpu.memory_space<vmem>>, vector<1x18x32xf32>,
    %c0_26 = arith.constant 0 : index
    %c0_27 = arith.constant 0 : index
    %c0_28 = arith.constant 0 : index
    %37 = vector.load %arg9[%c0_26, %c0_27, %c0_28] : memref<18x18x32xf32, #tpu.memory_space<vmem>>, vector<16x16x32xf32>
    %38 = vector.shape_cast %37 : vector<16x16x32xf32> to vector<256x32xf32>
    %c0_29 = arith.constant 0 : index
    %c1_30 = arith.constant 1 : index
    %c0_31 = arith.constant 0 : index
    %39 = vector.load %arg9[%c0_29, %c1_30, %c0_31] : memref<18x18x32xf32, #tpu.memory_space<vmem>>, vector<16x16x32xf32>
    %40 = vector.shape_cast %39 : vector<16x16x32xf32> to vector<256x32xf32>
    %c0_32 = arith.constant 0 : index
    %c2 = arith.constant 2 : index
    %c0_33 = arith.constant 0 : index
    %41 = vector.load %arg9[%c0_32, %c2, %c0_33] : memref<18x18x32xf32, #tpu.memory_space<vmem>>, vector<16x16x32xf32>
    %42 = vector.shape_cast %41 : vector<16x16x32xf32> to vector<256x32xf32>
    %c1_34 = arith.constant 1 : index
    %c0_35 = arith.constant 0 : index
    %c0_36 = arith.constant 0 : index
    %43 = vector.load %arg9[%c1_34, %c0_35, %c0_36] : memref<18x18x32xf32, #tpu.memory_space<vmem>>, vector<16x16x32xf32>
    %44 = vector.shape_cast %43 : vector<16x16x32xf32> to vector<256x32xf32>
    %c1_37 = arith.constant 1 : index
    %c1_38 = arith.constant 1 : index
    %c0_39 = arith.constant 0 : index
    %45 = vector.load %arg9[%c1_37, %c1_38, %c0_39] : memref<18x18x32xf32, #tpu.memory_space<vmem>>, vector<16x16x32xf32>
    %46 = vector.shape_cast %45 : vector<16x16x32xf32> to vector<256x32xf32>
    %c1_40 = arith.constant 1 : index
    %c2_41 = arith.constant 2 : index
    %c0_42 = arith.constant 0 : index
    %47 = vector.load %arg9[%c1_40, %c2_41, %c0_42] : memref<18x18x32xf32, #tpu.memory_space<vmem>>, vector<16x16x32xf32>
    %48 = vector.shape_cast %47 : vector<16x16x32xf32> to vector<256x32xf32>
    %c2_43 = arith.constant 2 : index
    %c0_44 = arith.constant 0 : index
    %c0_45 = arith.constant 0 : index
    %49 = vector.load %arg9[%c2_43, %c0_44, %c0_45] : memref<18x18x32xf32, #tpu.memory_space<vmem>>, vector<16x16x32xf32>
    %50 = vector.shape_cast %49 : vector<16x16x32xf32> to vector<256x32xf32>
    %c2_46 = arith.constant 2 : index
    %c1_47 = arith.constant 1 : index
    %c0_48 = arith.constant 0 : index
    %51 = vector.load %arg9[%c2_46, %c1_47, %c0_48] : memref<18x18x32xf32, #tpu.memory_space<vmem>>, vector<16x16x32xf32>
    %52 = vector.shape_cast %51 : vector<16x16x32xf32> to vector<256x32xf32>
    %c2_49 = arith.constant 2 : index
    %c2_50 = arith.constant 2 : index
    %c0_51 = arith.constant 0 : index
    %53 = vector.load %arg9[%c2_49, %c2_50, %c0_51] : memref<18x18x32xf32, #tpu.memory_space<vmem>>, vector<16x16x32xf32>
    %54 = vector.shape_cast %53 : vector<16x16x32xf32> to vector<256x32xf32>
    %55 = tpu.concatenate %38, %40, %42, %44, %46, %48, %50, %52, %54 in 1 : vector<256x32xf32>, vector<256x32xf32>, vector<256x32xf32>, vector<256x32xf32>, vector<256x32xf32>, vector<256x32xf32>, vector<256x32xf32>, vector<256x32xf32>, vector<256x32xf32> -> vector<256x288xf32>
    %c0_52 = arith.constant 0 : index
    %c0_53 = arith.constant 0 : index
    %56 = vector.load %arg6[%c0_52, %c0_53] : memref<288x32xf32, #tpu.memory_space<vmem>>, vector<288x32xf32>
    %cst_54 = arith.constant dense<0.000000e+00> : vector<256x32xf32>
    %57 = tpu.matmul %55, %56, %cst_54 {dimension_numbers = #tpu.dot_dimension_numbers<[1], [0], [0], [1], [0, 0, 1, 1], [], []>} : vector<256x288xf32>, vector<288x32xf32>, vector<256x32xf32> -> vector<256x32xf32>
    %c0_55 = arith.constant 0 : index
    %c0_56 = arith.constant 0 : index
    %58 = vector.load %arg7[%c0_55, %c0_56] : memref<1x32xf32, #tpu.memory_space<vmem>>, vector<1x32xf32>
    %59 = vector.broadcast %58 : vector<1x32xf32> to vector<256x32xf32>
    %60 = arith.addf %57, %59 : vector<256x32xf32>
    %61 = arith.addf %25, %60 : vector<256x32xf32>
    %cst_57 = arith.constant 0.000000e+00 : f32
    %62 = vector.broadcast %cst_57 : f32 to vector<256x32xf32>
    %63 = arith.maximumf %61, %62 : vector<256x32xf32>
    %64 = vector.shape_cast %63 : vector<256x32xf32> to vector<16x16x32xf32>
    %c0_58 = arith.constant 0 : index
    %c0_59 = arith.constant 0 : index
    %c0_60 = arith.constant 0 : index
    %c0_61 = arith.constant 0 : index
    %65 = vector.load %arg8[%c0_58, %c0_59, %c0_60, %c0_61] : memref<1x16x16x32xf32, #tpu.memory_space<vmem>>, vector<1x16x16x32xf32>
    %66 = vector.shape_cast %65 : vector<1x16x16x32xf32> to vector<16x16x32xf32>
    %67 = vector.shape_cast %64 : vector<16x16x32xf32> to vector<1x16x16x32xf32>
    tpu.vector_store %arg8[%c0_58, %c0_59, %c0_60, %c0_61], %67 {strides = array<i32>} : memref<1x16x16x32xf32, #tpu.memory_space<vmem>>, vector<1x16x16x32xf32>,
    return
  }
  func.func @transform_0(%arg0: i32) -> (i32, i32, i32) {
    %c0_i32 = arith.constant 0 : i32
    %c0_i32_0 = arith.constant 0 : i32
    %c0_i32_1 = arith.constant 0 : i32
    return %arg0, %c0_i32, %c0_i32_0 : i32, i32, i32
  }
  func.func @transform_1(%arg0: i32) -> (i32, i32) {
    %c0_i32 = arith.constant 0 : i32
    %c0_i32_0 = arith.constant 0 : i32
    %c0_i32_1 = arith.constant 0 : i32
    return %c0_i32, %c0_i32_0 : i32, i32
  }
  func.func @transform_2(%arg0: i32) -> (i32, i32) {
    %c0_i32 = arith.constant 0 : i32
    %c0_i32_0 = arith.constant 0 : i32
    %c0_i32_1 = arith.constant 0 : i32
    return %c0_i32, %c0_i32_0 : i32, i32
  }
  func.func @transform_3(%arg0: i32) -> (i32, i32) {
    %c0_i32 = arith.constant 0 : i32
    %c0_i32_0 = arith.constant 0 : i32
    %c0_i32_1 = arith.constant 0 : i32
    return %c0_i32, %c0_i32_0 : i32, i32
  }
  func.func @transform_4(%arg0: i32) -> (i32, i32) {
    %c0_i32 = arith.constant 0 : i32
    %c0_i32_0 = arith.constant 0 : i32
    %c0_i32_1 = arith.constant 0 : i32
    return %c0_i32, %c0_i32_0 : i32, i32
  }
  func.func @transform_5(%arg0: i32) -> (i32, i32) {
    %c0_i32 = arith.constant 0 : i32
    %c0_i32_0 = arith.constant 0 : i32
    %c0_i32_1 = arith.constant 0 : i32
    return %c0_i32, %c0_i32_0 : i32, i32
  }
  func.func @transform_6(%arg0: i32) -> (i32, i32) {
    %c0_i32 = arith.constant 0 : i32
    %c0_i32_0 = arith.constant 0 : i32
    %c0_i32_1 = arith.constant 0 : i32
    return %c0_i32, %c0_i32_0 : i32, i32
  }
  func.func @transform_7(%arg0: i32) -> (i32, i32, i32, i32) {
    %c0_i32 = arith.constant 0 : i32
    %c0_i32_0 = arith.constant 0 : i32
    %c0_i32_1 = arith.constant 0 : i32
    %c0_i32_2 = arith.constant 0 : i32
    return %arg0, %c0_i32, %c0_i32_0, %c0_i32_1 : i32, i32, i32, i32
  }
}

</mosaic_0001>

<llo_original>
// kernel: tpu_custom_call.1
$region0: #{tpu_custom_call.1}
  #allocation0 [shape = 'u32[]', space=smem, size = 0x4, offset = 0x4, fixed_abs, tag = 'smem constant byte address 0x4 - core index']
  #allocation1 [shape = 'u32[72,128]{1,0:T(1,128)}', space=vmem, size = 0x9000, scoped, tag = 'internal scratch']
  #allocation2 [shape = 'f32[18,18,32]{2,1,0:T(8,128)}', space=vmem, size = 0x36000, scoped, tag = 'scratch operand']
  %s0 = inlined_call_operand.vmem [shape: f32[2,256,4], index: 0, kind: input, shape index: {}]
  %s1 = inlined_call_operand.vmem [shape: f32[4,32], index: 1, kind: input, shape index: {}]
  %s2 = inlined_call_operand.vmem [shape: f32[1,32], index: 2, kind: input, shape index: {}]
  %s3 = inlined_call_operand.vmem [shape: f32[32,8], index: 3, kind: input, shape index: {}]
  %s4 = inlined_call_operand.vmem [shape: f32[8,32], index: 4, kind: input, shape index: {}]
  %s5 = inlined_call_operand.vmem [shape: f32[288,32], index: 5, kind: input, shape index: {}]
  %s6 = inlined_call_operand.vmem [shape: f32[1,32], index: 6, kind: input, shape index: {}]
  %s7 = inlined_call_operand.hbm [shape: f32[2,16,16,32], index: 7, kind: output, shape index: {}]
  %s8 = sld [smem:[#allocation0]]
  $region61: #{tpu_custom_call.1} parent=0
    _
  %s10 = ssub.s32 1, %s8
  %s11 = scalar_select 0, %s10, %s8
  $region1: #{tpu_custom_call.1} parent=0
    #allocation3 [shape = 'u8[262144]{0}', space=vmem, size = 0x40000, scoped, tag = 'output window, operand 0']
    #allocation4 [shape = 's32[2]{0}', space=sflag, size = 0x8, scoped, tag = 'scoped memory for tpu_custom_call.1']
    %12 = vsyncpa [#allocation4], 0
    %s13 = scalar_lea.sflag [#allocation4], 1
    %14 = vsyncpa %s13, 0
    loop: start=0, step=1, limit=4
    $region2: #{tpu_custom_call.1} parent=1 // loop_pre_header
      _
    $region3: #{tpu_custom_call.1} parent=1 // loop_header
      %s16 = sphi 0, %s20
      %p17 = scmp.ge.s32.totalorder %s16, 4
      %s26 = sphi 0, %s28
      %s29 = sphi 0, %s26
      %s30 = sphi 0, %s29
      %s46 = sphi 0, %s30
      %s50 = sphi 0, %s50
      %s52 = sphi 0, %s50
      %s53 = sphi 0, %s52
      %s67 = sphi 0, %s53
      %s71 = sphi 0, %s71
      %s73 = sphi 0, %s71
      %s74 = sphi 0, %s73
      %s88 = sphi 0, %s74
      %s92 = sphi 0, %s92
      %s94 = sphi 0, %s92
      %s95 = sphi 0, %s94
      %s109 = sphi 0, %s95
      %s113 = sphi 0, %s113
      %s115 = sphi 0, %s113
      %s116 = sphi 0, %s115
      %s130 = sphi 0, %s116
      %s134 = sphi 0, %s134
      %s136 = sphi 0, %s134
      %s137 = sphi 0, %s136
      %s151 = sphi 0, %s137
      %s155 = sphi 0, %s155
      %s157 = sphi 0, %s155
      %s158 = sphi 0, %s157
      %s172 = sphi 0, %s158
      %s178 = sphi 0, %s180
      %s181 = sphi 0, %s178
      %s182 = sphi 0, %s181
      %s198 = sphi 0, %s182
    $region4: #{tpu_custom_call.1} parent=1 // loop_header_branch
      %19 = sbr.rel (%p17) target = $region8
    $region5: #{tpu_custom_call.1} parent=1 // loop_body
      %s21 = ssub.s32 %s16, 1
      %s22 = ssub.s32 %s16, 2
      %s23 = sadd.s32 %s16, 1
      %s24 = ssub.s32 %s16, %s23
      %p25 = scmp.eq.s32.totalorder %s24, 0
      %s27 = sadd.s32 %s26, 1
      %s28 = scalar_select %p25, %s26, %s27
      %p31 = pneg %p25
      %p32 = scmp.eq.s32.totalorder %s16, 1
      %p33 = por %p31, %p32
      %p34 = scmp.ne.s32.totalorder %s26, %s29
      %p35 = scmp.eq.s32.totalorder %s16, 0
      %p36 = por %p34, %p35
      %p37 = scmp.ne.s32.totalorder %s26, %s29
      %p38 = scmp.eq.s32.totalorder %s21, 1
      %p39 = por %p37, %p38
      %p40 = scmp.ne.s32.totalorder %s29, %s30
      %p41 = scmp.eq.s32.totalorder %s21, 0
      %p42 = por %p40, %p41
      %p43 = scmp.ne.s32.totalorder %s29, %s30
      %p44 = scmp.eq.s32.totalorder %s22, 1
      %p45 = por %p43, %p44
      %p47 = scmp.ne.s32.totalorder %s30, %s46
      %p48 = scmp.eq.s32.totalorder %s22, 0
      %p49 = por %p47, %p48
      %s51 = sadd.s32 %s50, 1
      %p54 = scmp.eq.s32.totalorder %s16, 1
      %p55 = scmp.ne.s32.totalorder %s50, %s52
      %p56 = scmp.eq.s32.totalorder %s16, 0
      %p57 = por %p55, %p56
      %p58 = scmp.ne.s32.totalorder %s50, %s52
      %p59 = scmp.eq.s32.totalorder %s21, 1
      %p60 = por %p58, %p59
      %p61 = scmp.ne.s32.totalorder %s52, %s53
      %p62 = scmp.eq.s32.totalorder %s21, 0
      %p63 = por %p61, %p62
      %p64 = scmp.ne.s32.totalorder %s52, %s53
      %p65 = scmp.eq.s32.totalorder %s22, 1
      %p66 = por %p64, %p65
      %p68 = scmp.ne.s32.totalorder %s53, %s67
      %p69 = scmp.eq.s32.totalorder %s22, 0
      %p70 = por %p68, %p69
      %s72 = sadd.s32 %s71, 1
      %p75 = scmp.eq.s32.totalorder %s16, 1
      %p76 = scmp.ne.s32.totalorder %s71, %s73
      %p77 = scmp.eq.s32.totalorder %s16, 0
      %p78 = por %p76, %p77
      %p79 = scmp.ne.s32.totalorder %s71, %s73
      %p80 = scmp.eq.s32.totalorder %s21, 1
      %p81 = por %p79, %p80
      %p82 = scmp.ne.s32.totalorder %s73, %s74
      %p83 = scmp.eq.s32.totalorder %s21, 0
      %p84 = por %p82, %p83
      %p85 = scmp.ne.s32.totalorder %s73, %s74
      %p86 = scmp.eq.s32.totalorder %s22, 1
      %p87 = por %p85, %p86
      %p89 = scmp.ne.s32.totalorder %s74, %s88
      %p90 = scmp.eq.s32.totalorder %s22, 0
      %p91 = por %p89, %p90
      %s93 = sadd.s32 %s92, 1
      %p96 = scmp.eq.s32.totalorder %s16, 1
      %p97 = scmp.ne.s32.totalorder %s92, %s94
      %p98 = scmp.eq.s32.totalorder %s16, 0
      %p99 = por %p97, %p98
      %p100 = scmp.ne.s32.totalorder %s92, %s94
      %p101 = scmp.eq.s32.totalorder %s21, 1
      %p102 = por %p100, %p101
      %p103 = scmp.ne.s32.totalorder %s94, %s95
      %p104 = scmp.eq.s32.totalorder %s21, 0
      %p105 = por %p103, %p104
      %p106 = scmp.ne.s32.totalorder %s94, %s95
      %p107 = scmp.eq.s32.totalorder %s22, 1
      %p108 = por %p106, %p107
      %p110 = scmp.ne.s32.totalorder %s95, %s109
      %p111 = scmp.eq.s32.totalorder %s22, 0
      %p112 = por %p110, %p111
      %s114 = sadd.s32 %s113, 1
      %p117 = scmp.eq.s32.totalorder %s16, 1
      %p118 = scmp.ne.s32.totalorder %s113, %s115
      %p119 = scmp.eq.s32.totalorder %s16, 0
      %p120 = por %p118, %p119
      %p121 = scmp.ne.s32.totalorder %s113, %s115
      %p122 = scmp.eq.s32.totalorder %s21, 1
      %p123 = por %p121, %p122
      %p124 = scmp.ne.s32.totalorder %s115, %s116
      %p125 = scmp.eq.s32.totalorder %s21, 0
      %p126 = por %p124, %p125
      %p127 = scmp.ne.s32.totalorder %s115, %s116
      %p128 = scmp.eq.s32.totalorder %s22, 1
      %p129 = por %p127, %p128
      %p131 = scmp.ne.s32.totalorder %s116, %s130
      %p132 = scmp.eq.s32.totalorder %s22, 0
      %p133 = por %p131, %p132
      %s135 = sadd.s32 %s134, 1
      %p138 = scmp.eq.s32.totalorder %s16, 1
      %p139 = scmp.ne.s32.totalorder %s134, %s136
      %p140 = scmp.eq.s32.totalorder %s16, 0
      %p141 = por %p139, %p140
      %p142 = scmp.ne.s32.totalorder %s134, %s136
      %p143 = scmp.eq.s32.totalorder %s21, 1
      %p144 = por %p142, %p143
      %p145 = scmp.ne.s32.totalorder %s136, %s137
      %p146 = scmp.eq.s32.totalorder %s21, 0
      %p147 = por %p145, %p146
      %p148 = scmp.ne.s32.totalorder %s136, %s137
      %p149 = scmp.eq.s32.totalorder %s22, 1
      %p150 = por %p148, %p149
      %p152 = scmp.ne.s32.totalorder %s137, %s151
      %p153 = scmp.eq.s32.totalorder %s22, 0
      %p154 = por %p152, %p153
      %s156 = sadd.s32 %s155, 1
      %p159 = scmp.eq.s32.totalorder %s16, 1
      %p160 = scmp.ne.s32.totalorder %s155, %s157
      %p161 = scmp.eq.s32.totalorder %s16, 0
      %p162 = por %p160, %p161
      %p163 = scmp.ne.s32.totalorder %s155, %s157
      %p164 = scmp.eq.s32.totalorder %s21, 1
      %p165 = por %p163, %p164
      %p166 = scmp.ne.s32.totalorder %s157, %s158
      %p167 = scmp.eq.s32.totalorder %s21, 0
      %p168 = por %p166, %p167
      %p169 = scmp.ne.s32.totalorder %s157, %s158
      %p170 = scmp.eq.s32.totalorder %s22, 1
      %p171 = por %p169, %p170
      %p173 = scmp.ne.s32.totalorder %s158, %s172
      %p174 = scmp.eq.s32.totalorder %s22, 0
      %p175 = por %p173, %p174
      %s176 = ssub.s32 %s16, %s23
      %p177 = scmp.eq.s32.totalorder %s176, 0
      %s179 = sadd.s32 %s178, 1
      %s180 = scalar_select %p177, %s178, %s179
      %p183 = pneg %p177
      %p184 = scmp.eq.s32.totalorder %s16, 1
      %p185 = por %p183, %p184
      %p186 = scmp.ne.s32.totalorder %s178, %s181
      %p187 = scmp.eq.s32.totalorder %s16, 0
      %p188 = por %p186, %p187
      %p189 = scmp.ne.s32.totalorder %s178, %s181
      %p190 = scmp.eq.s32.totalorder %s21, 1
      %p191 = por %p189, %p190
      %p192 = scmp.ne.s32.totalorder %s181, %s182
      %p193 = scmp.eq.s32.totalorder %s21, 0
      %p194 = por %p192, %p193
      %p195 = scmp.ne.s32.totalorder %s181, %s182
      %p196 = scmp.eq.s32.totalorder %s22, 1
      %p197 = por %p195, %p196
      %p199 = scmp.ne.s32.totalorder %s182, %s198
      %p200 = scmp.eq.s32.totalorder %s22, 0
      %p201 = por %p199, %p200
      %p202 = scmp.le.s32.totalorder 1, %s16
      %p203 = scmp.lt.s32.totalorder %s16, 3
      %p204 = pnand %p202, %p203
      %p205 = pneg %p204
      // Predicated region
      $region9: #{tpu_custom_call.1} parent=5 // pred_check
        _
      $region10: #{tpu_custom_call.1} parent=5 // pred_check_branch
        %207 = sbr.rel (%p204) target = $region12
      $region11: #{tpu_custom_call.1} parent=5 // pred_region
        %s208 = ssub.s32 %s16, 1
        // Predicated region
        $region13: #{tpu_custom_call.1} parent=11 // pred_check
          %p209 = pneg %p63
        $region14: #{tpu_custom_call.1} parent=11 // pred_check_branch
          %211 = sbr.rel (%p209) target = $region16
        $region15: #{tpu_custom_call.1} parent=11 // pred_region
          _
        $region16: #{tpu_custom_call.1} parent=11 // pred_fallthru
          _
        // Predicated region
        $region17: #{tpu_custom_call.1} parent=11 // pred_check
          %p212 = pneg %p84
        $region18: #{tpu_custom_call.1} parent=11 // pred_check_branch
          %214 = sbr.rel (%p212) target = $region20
        $region19: #{tpu_custom_call.1} parent=11 // pred_region
          _
        $region20: #{tpu_custom_call.1} parent=11 // pred_fallthru
          _
        // Predicated region
        $region21: #{tpu_custom_call.1} parent=11 // pred_check
          %p215 = pneg %p105
        $region22: #{tpu_custom_call.1} parent=11 // pred_check_branch
          %217 = sbr.rel (%p215) target = $region24
        $region23: #{tpu_custom_call.1} parent=11 // pred_region
          _
        $region24: #{tpu_custom_call.1} parent=11 // pred_fallthru
          _
        // Predicated region
        $region25: #{tpu_custom_call.1} parent=11 // pred_check
          %p218 = pneg %p126
        $region26: #{tpu_custom_call.1} parent=11 // pred_check_branch
          %220 = sbr.rel (%p218) target = $region28
        $region27: #{tpu_custom_call.1} parent=11 // pred_region
          _
        $region28: #{tpu_custom_call.1} parent=11 // pred_fallthru
          _
        // Predicated region
        $region29: #{tpu_custom_call.1} parent=11 // pred_check
          %p221 = pneg %p147
        $region30: #{tpu_custom_call.1} parent=11 // pred_check_branch
          %223 = sbr.rel (%p221) target = $region32
        $region31: #{tpu_custom_call.1} parent=11 // pred_region
          _
        $region32: #{tpu_custom_call.1} parent=11 // pred_fallthru
          _
        // Predicated region
        $region33: #{tpu_custom_call.1} parent=11 // pred_check
          %p224 = pneg %p168
        $region34: #{tpu_custom_call.1} parent=11 // pred_check_branch
          %226 = sbr.rel (%p224) target = $region36
        $region35: #{tpu_custom_call.1} parent=11 // pred_region
          _
        $region36: #{tpu_custom_call.1} parent=11 // pred_fallthru
          _
      $region12: #{tpu_custom_call.1} parent=5 // pred_fallthru
        _
      %p227 = scmp.lt.s32.totalorder %s16, 2
      // Predicated region
      $region37: #{tpu_custom_call.1} parent=5 // pred_check
        %p228 = pneg %p227
      $region38: #{tpu_custom_call.1} parent=5 // pred_check_branch
        %230 = sbr.rel (%p228) target = $region40
      $region39: #{tpu_custom_call.1} parent=5 // pred_region
        // Predicated region
        $region41: #{tpu_custom_call.1} parent=39 // pred_check
          %p231 = pneg %p36
        $region42: #{tpu_custom_call.1} parent=39 // pred_check_branch
          %233 = sbr.rel (%p231) target = $region44
        $region43: #{tpu_custom_call.1} parent=39 // pred_region
          %p234 = scmp.lt.s32.totalorder %s16, 1
          %s235 = scalar_select %p234, %s16, 1
          %s236 = smul.addr %s235, 32
          %s237 = smul.addr %s236, 8
          %s238 = scalar_lea.vmem %s0, %s237
        $region44: #{tpu_custom_call.1} parent=39 // pred_fallthru
          _
      $region40: #{tpu_custom_call.1} parent=5 // pred_fallthru
        _
      %p239 = scmp.le.s32.totalorder 1, %s16
      %p240 = scmp.lt.s32.totalorder %s16, 3
      %p241 = pnand %p239, %p240
      %p242 = pneg %p241
      // Predicated region
      $region45: #{tpu_custom_call.1} parent=5 // pred_check
        _
      $region46: #{tpu_custom_call.1} parent=5 // pred_check_branch
        %244 = sbr.rel (%p241) target = $region48
      $region47: #{tpu_custom_call.1} parent=5 // pred_region
        %s245 = ssub.s32 %s16, 1
        %p246 = scmp.lt.s32.totalorder %s21, 1
        %s247 = scalar_select %p246, %s21, 1
        %s248 = smul.addr %s247, 32
        %s249 = smul.addr %s248, 8
        %s250 = scalar_lea.vmem %s0, %s249
        %p251 = pneg %p42
        %p252 = pneg %p39
        %p253 = pneg %p63
        %p254 = pneg %p60
        %p255 = pneg %p84
        %p256 = pneg %p81
        %p257 = pneg %p105
        %p258 = pneg %p102
        %p259 = pneg %p126
        %p260 = pneg %p123
        %p261 = pneg %p147
        %p262 = pneg %p144
        %p263 = pneg %p168
        %p264 = pneg %p165
        %p265 = pneg %p194
        %p266 = pneg %p191
        %s267 = sand.u32 %s181, 1
        %s268 = scalar_lea.sflag [#allocation4], %s267
        %s269 = sand.u32 %s181, 1
        %s270 = smul.addr %s269, 256
        %s271 = scalar_lea.vmem [#allocation3], %s270
        %p272 = scmp.lt.s32.totalorder %s21, 1
        %s273 = scalar_select %p272, %s21, 1
        %s274 = smul.addr %s273, 32
        %s275 = smul.addr %s274, 8
        %s276 = scalar_lea.vmem %s0, %s275
        %v277 = vld [vmem:[%s276] sm:$0xff]
        %v278 = vld [vmem:[%s276 + $0x8] sm:$0xff]
        %v279 = vld [vmem:[%s276 + $0x10] sm:$0xff]
        %v280 = vld [vmem:[%s276 + $0x18] sm:$0xff]
        %v281 = vld [vmem:[%s276 + $0x20] sm:$0xff]
        %v282 = vld [vmem:[%s276 + $0x28] sm:$0xff]
        %v283 = vld [vmem:[%s276 + $0x30] sm:$0xff]
        %v284 = vld [vmem:[%s276 + $0x38] sm:$0xff]
        %v285 = vld [vmem:[%s276 + $0x40] sm:$0xff]
        %v286 = vld [vmem:[%s276 + $0x48] sm:$0xff]
        %v287 = vld [vmem:[%s276 + $0x50] sm:$0xff]
        %v288 = vld [vmem:[%s276 + $0x58] sm:$0xff]
        %v289 = vld [vmem:[%s276 + $0x60] sm:$0xff]
        %v290 = vld [vmem:[%s276 + $0x68] sm:$0xff]
        %v291 = vld [vmem:[%s276 + $0x70] sm:$0xff]
        %v292 = vld [vmem:[%s276 + $0x78] sm:$0xff]
        %v293 = vld [vmem:[%s276 + $0x80] sm:$0xff]
        %v294 = vld [vmem:[%s276 + $0x88] sm:$0xff]
        %v295 = vld [vmem:[%s276 + $0x90] sm:$0xff]
        %v296 = vld [vmem:[%s276 + $0x98] sm:$0xff]
        %v297 = vld [vmem:[%s276 + $0xa0] sm:$0xff]
        %v298 = vld [vmem:[%s276 + $0xa8] sm:$0xff]
        %v299 = vld [vmem:[%s276 + $0xb0] sm:$0xff]
        %v300 = vld [vmem:[%s276 + $0xb8] sm:$0xff]
        %v301 = vld [vmem:[%s276 + $0xc0] sm:$0xff]
        %v302 = vld [vmem:[%s276 + $0xc8] sm:$0xff]
        %v303 = vld [vmem:[%s276 + $0xd0] sm:$0xff]
        %v304 = vld [vmem:[%s276 + $0xd8] sm:$0xff]
        %v305 = vld [vmem:[%s276 + $0xe0] sm:$0xff]
        %v306 = vld [vmem:[%s276 + $0xe8] sm:$0xff]
        %v307 = vld [vmem:[%s276 + $0xf0] sm:$0xff]
        %v308 = vld [vmem:[%s276 + $0xf8] sm:$0xff]
        %v309 = vld [vmem:[%s1] sm:$0xf]
        %v310 = vld [vmem:[%s2] sm:$0x1]
        %v312 = vperm.slane %v310, 0
        %vm314 = vcmask 31744
        %v316 = vsel %vm314, %v277, 0
        %v319 = vsel %vm314, %v278, 0
        %v322 = vsel %vm314, %v279, 0
        %v325 = vsel %vm314, %v280, 0
        %v328 = vsel %vm314, %v281, 0
        %v331 = vsel %vm314, %v282, 0
        %v334 = vsel %vm314, %v283, 0
        %v337 = vsel %vm314, %v284, 0
        %v340 = vsel %vm314, %v285, 0
        %v343 = vsel %vm314, %v286, 0
        %v346 = vsel %vm314, %v287, 0
        %v349 = vsel %vm314, %v288, 0
        %v352 = vsel %vm314, %v289, 0
        %v355 = vsel %vm314, %v290, 0
        %v358 = vsel %vm314, %v291, 0
        %v361 = vsel %vm314, %v292, 0
        %v364 = vsel %vm314, %v293, 0
        %v367 = vsel %vm314, %v294, 0
        %v370 = vsel %vm314, %v295, 0
        %v373 = vsel %vm314, %v296, 0
        %v376 = vsel %vm314, %v297, 0
        %v379 = vsel %vm314, %v298, 0
        %v382 = vsel %vm314, %v299, 0
        %v385 = vsel %vm314, %v300, 0
        %v388 = vsel %vm314, %v301, 0
        %v391 = vsel %vm314, %v302, 0
        %v394 = vsel %vm314, %v303, 0
        %v397 = vsel %vm314, %v304, 0
        %v400 = vsel %vm314, %v305, 0
        %v403 = vsel %vm314, %v306, 0
        %v406 = vsel %vm314, %v307, 0
        %v409 = vsel %vm314, %v308, 0
        %vm411 = vcmask 1043456
        %v413 = vsel %vm411, %v309, 0
        %415 = vmatpush.msra.mxu0 0.0
        %416 = vmatpush.msra.mxu0 0.0
        %417 = vmatpush.msra.mxu0 0.0
        %418 = vmatpush.msra.mxu0 0.0
        %419 = vmatpush.msra.mxu0 0.0
        %420 = vmatpush.msra.mxu0 0.0
        %421 = vmatpush.msra.mxu0 0.0
        %422 = vmatpush.msra.mxu0 0.0
        %423 = vmatpush.msra.mxu0 0.0
        %424 = vmatpush.msra.mxu0 0.0
        %425 = vmatpush.msra.mxu0 0.0
        %426 = vmatpush.msra.mxu0 0.0
        %427 = vmatpush.msra.mxu0 0.0
        %428 = vmatpush.msra.mxu0 0.0
        %429 = vmatpush.msra.mxu0 0.0
        %430 = vmatpush.msra.mxu0 %v413
        %431 = vmatmul.f32.gmra.mxu0 %v316
        %v432 = vpop.f32.mrf.mxu0
        %v433 = vadd.f32 %v312, %v432
        %434 = vmatmul.f32.gmra.mxu0 %v319
        %v435 = vpop.f32.mrf.mxu0
        %v436 = vadd.f32 %v312, %v435
        %437 = vmatmul.f32.gmra.mxu0 %v322
        %v438 = vpop.f32.mrf.mxu0
        %v439 = vadd.f32 %v312, %v438
        %440 = vmatmul.f32.gmra.mxu0 %v325
        %v441 = vpop.f32.mrf.mxu0
        %v442 = vadd.f32 %v312, %v441
        %443 = vmatmul.f32.gmra.mxu0 %v328
        %v444 = vpop.f32.mrf.mxu0
        %v445 = vadd.f32 %v312, %v444
        %446 = vmatmul.f32.gmra.mxu0 %v331
        %v447 = vpop.f32.mrf.mxu0
        %v448 = vadd.f32 %v312, %v447
        %449 = vmatmul.f32.gmra.mxu0 %v334
        %v450 = vpop.f32.mrf.mxu0
        %v451 = vadd.f32 %v312, %v450
        %452 = vmatmul.f32.gmra.mxu0 %v337
        %v453 = vpop.f32.mrf.mxu0
        %v454 = vadd.f32 %v312, %v453
        %455 = vmatmul.f32.gmra.mxu0 %v340
        %v456 = vpop.f32.mrf.mxu0
        %v457 = vadd.f32 %v312, %v456
        %458 = vmatmul.f32.gmra.mxu0 %v343
        %v459 = vpop.f32.mrf.mxu0
        %v460 = vadd.f32 %v312, %v459
        %461 = vmatmul.f32.gmra.mxu0 %v346
        %v462 = vpop.f32.mrf.mxu0
        %v463 = vadd.f32 %v312, %v462
        %464 = vmatmul.f32.gmra.mxu0 %v349
        %v465 = vpop.f32.mrf.mxu0
        %v466 = vadd.f32 %v312, %v465
        %467 = vmatmul.f32.gmra.mxu0 %v352
        %v468 = vpop.f32.mrf.mxu0
        %v469 = vadd.f32 %v312, %v468
        %470 = vmatmul.f32.gmra.mxu0 %v355
        %v471 = vpop.f32.mrf.mxu0
        %v472 = vadd.f32 %v312, %v471
        %473 = vmatmul.f32.gmra.mxu0 %v358
        %v474 = vpop.f32.mrf.mxu0
        %v475 = vadd.f32 %v312, %v474
        %476 = vmatmul.f32.gmra.mxu0 %v361
        %v477 = vpop.f32.mrf.mxu0
        %v478 = vadd.f32 %v312, %v477
        %479 = vmatmul.f32.gmra.mxu0 %v364
        %v480 = vpop.f32.mrf.mxu0
        %v481 = vadd.f32 %v312, %v480
        %482 = vmatmul.f32.gmra.mxu0 %v367
        %v483 = vpop.f32.mrf.mxu0
        %v484 = vadd.f32 %v312, %v483
        %485 = vmatmul.f32.gmra.mxu0 %v370
        %v486 = vpop.f32.mrf.mxu0
        %v487 = vadd.f32 %v312, %v486
        %488 = vmatmul.f32.gmra.mxu0 %v373
        %v489 = vpop.f32.mrf.mxu0
        %v490 = vadd.f32 %v312, %v489
        %491 = vmatmul.f32.gmra.mxu0 %v376
        %v492 = vpop.f32.mrf.mxu0
        %v493 = vadd.f32 %v312, %v492
        %494 = vmatmul.f32.gmra.mxu0 %v379
        %v495 = vpop.f32.mrf.mxu0
        %v496 = vadd.f32 %v312, %v495
        %497 = vmatmul.f32.gmra.mxu0 %v382
        %v498 = vpop.f32.mrf.mxu0
        %v499 = vadd.f32 %v312, %v498
        %500 = vmatmul.f32.gmra.mxu0 %v385
        %v501 = vpop.f32.mrf.mxu0
        %v502 = vadd.f32 %v312, %v501
        %503 = vmatmul.f32.gmra.mxu0 %v388
        %v504 = vpop.f32.mrf.mxu0
        %v505 = vadd.f32 %v312, %v504
        %506 = vmatmul.f32.gmra.mxu0 %v391
        %v507 = vpop.f32.mrf.mxu0
        %v508 = vadd.f32 %v312, %v507
        %509 = vmatmul.f32.gmra.mxu0 %v394
        %v510 = vpop.f32.mrf.mxu0
        %v511 = vadd.f32 %v312, %v510
        %512 = vmatmul.f32.gmra.mxu0 %v397
        %v513 = vpop.f32.mrf.mxu0
        %v514 = vadd.f32 %v312, %v513
        %515 = vmatmul.f32.gmra.mxu0 %v400
        %v516 = vpop.f32.mrf.mxu0
        %v517 = vadd.f32 %v312, %v516
        %518 = vmatmul.f32.gmra.mxu0 %v403
        %v519 = vpop.f32.mrf.mxu0
        %v520 = vadd.f32 %v312, %v519
        %521 = vmatmul.f32.gmra.mxu0 %v406
        %v522 = vpop.f32.mrf.mxu0
        %v523 = vadd.f32 %v312, %v522
        %524 = vmatmul.f32.gmra.mxu0 %v409
        %v525 = vpop.f32.mrf.mxu0
        %v526 = vadd.f32 %v312, %v525
        %527 = vdwg.mxu0
        %v528 = vmax.f32 %v433, 0.0
        %v529 = vmax.f32 %v436, 0.0
        %v530 = vmax.f32 %v439, 0.0
        %v531 = vmax.f32 %v442, 0.0
        %v532 = vmax.f32 %v445, 0.0
        %v533 = vmax.f32 %v448, 0.0
        %v534 = vmax.f32 %v451, 0.0
        %v535 = vmax.f32 %v454, 0.0
        %v536 = vmax.f32 %v457, 0.0
        %v537 = vmax.f32 %v460, 0.0
        %v538 = vmax.f32 %v463, 0.0
        %v539 = vmax.f32 %v466, 0.0
        %v540 = vmax.f32 %v469, 0.0
        %v541 = vmax.f32 %v472, 0.0
        %v542 = vmax.f32 %v475, 0.0
        %v543 = vmax.f32 %v478, 0.0
        %v544 = vmax.f32 %v481, 0.0
        %v545 = vmax.f32 %v484, 0.0
        %v546 = vmax.f32 %v487, 0.0
        %v547 = vmax.f32 %v490, 0.0
        %v548 = vmax.f32 %v493, 0.0
        %v549 = vmax.f32 %v496, 0.0
        %v550 = vmax.f32 %v499, 0.0
        %v551 = vmax.f32 %v502, 0.0
        %v552 = vmax.f32 %v505, 0.0
        %v553 = vmax.f32 %v508, 0.0
        %v554 = vmax.f32 %v511, 0.0
        %v555 = vmax.f32 %v514, 0.0
        %v556 = vmax.f32 %v517, 0.0
        %v557 = vmax.f32 %v520, 0.0
        %v558 = vmax.f32 %v523, 0.0
        %v559 = vmax.f32 %v526, 0.0
        %vm560 = vcmask 261120
        %v561 = vsel %vm560, %v528, 0.0
        %v562 = vsel %vm560, %v529, 0.0
        %v563 = vadd.f32 %v561, %v562
        %v564 = vsel %vm560, %v530, 0.0
        %v565 = vadd.f32 %v563, %v564
        %v566 = vsel %vm560, %v531, 0.0
        %v567 = vadd.f32 %v565, %v566
        %v568 = vsel %vm560, %v532, 0.0
        %v569 = vadd.f32 %v567, %v568
        %v570 = vsel %vm560, %v533, 0.0
        %v571 = vadd.f32 %v569, %v570
        %v572 = vsel %vm560, %v534, 0.0
        %v573 = vadd.f32 %v571, %v572
        %v574 = vsel %vm560, %v535, 0.0
        %v575 = vadd.f32 %v573, %v574
        %v576 = vsel %vm560, %v536, 0.0
        %v577 = vadd.f32 %v575, %v576
        %v578 = vsel %vm560, %v537, 0.0
        %v579 = vadd.f32 %v577, %v578
        %v580 = vsel %vm560, %v538, 0.0
        %v581 = vadd.f32 %v579, %v580
        %v582 = vsel %vm560, %v539, 0.0
        %v583 = vadd.f32 %v581, %v582
        %v584 = vsel %vm560, %v540, 0.0
        %v585 = vadd.f32 %v583, %v584
        %v586 = vsel %vm560, %v541, 0.0
        %v587 = vadd.f32 %v585, %v586
        %v588 = vsel %vm560, %v542, 0.0
        %v589 = vadd.f32 %v587, %v588
        %v590 = vsel %vm560, %v543, 0.0
        %v591 = vadd.f32 %v589, %v590
        %v592 = vsel %vm560, %v544, 0.0
        %v593 = vadd.f32 %v591, %v592
        %v594 = vsel %vm560, %v545, 0.0
        %v595 = vadd.f32 %v593, %v594
        %v596 = vsel %vm560, %v546, 0.0
        %v597 = vadd.f32 %v595, %v596
        %v598 = vsel %vm560, %v547, 0.0
        %v599 = vadd.f32 %v597, %v598
        %v600 = vsel %vm560, %v548, 0.0
        %v601 = vadd.f32 %v599, %v600
        %v602 = vsel %vm560, %v549, 0.0
        %v603 = vadd.f32 %v601, %v602
        %v604 = vsel %vm560, %v550, 0.0
        %v605 = vadd.f32 %v603, %v604
        %v606 = vsel %vm560, %v551, 0.0
        %v607 = vadd.f32 %v605, %v606
        %v608 = vsel %vm560, %v552, 0.0
        %v609 = vadd.f32 %v607, %v608
        %v610 = vsel %vm560, %v553, 0.0
        %v611 = vadd.f32 %v609, %v610
        %v612 = vsel %vm560, %v554, 0.0
        %v613 = vadd.f32 %v611, %v612
        %v614 = vsel %vm560, %v555, 0.0
        %v615 = vadd.f32 %v613, %v614
        %v616 = vsel %vm560, %v556, 0.0
        %v617 = vadd.f32 %v615, %v616
        %v618 = vsel %vm560, %v557, 0.0
        %v619 = vadd.f32 %v617, %v618
        %v620 = vsel %vm560, %v558, 0.0
        %v621 = vadd.f32 %v619, %v620
        %v622 = vsel %vm560, %v559, 0.0
        %v623 = vadd.f32 %v621, %v622
        %v624 = vrot.slane %v623, 4
        %v625 = vadd.f32 %v623, %v624
        %v626 = vrot.slane %v625, 2
        %v627 = vadd.f32 %v625, %v626
        %v628 = vrot.slane %v627, 1
        %v629 = vadd.f32 %v627, %v628
        %v630 = vrcp.pop 256.0
        %v631 = vmul.f32 256.0, %v630
        %v632 = vsub.f32 1.0, %v631
        %v633 = vmul.f32 %v630, %v632
        %v634 = vadd.f32 %v630, %v633
        %vm635 = vweird.f32 %v630
        %v636 = vsel %vm635, %v630, %v634
        %v637 = vmul.f32 %v629, %v636
        %v638 = vld [vmem:[%s3] sm:$0xff]
        %v639 = vld [vmem:[%s3 + $0x8] sm:$0xff]
        %v640 = vld [vmem:[%s3 + $0x10] sm:$0xff]
        %v641 = vld [vmem:[%s3 + $0x18] sm:$0xff]
        %v643 = vsel %vm560, %v637, 0
        %645 = vmatpush.msra.mxu0 0.0
        %646 = vmatpush.msra.mxu0 0.0
        %647 = vmatpush.msra.mxu0 0.0
        %648 = vmatpush.msra.mxu0 0.0
        %649 = vmatpush.msra.mxu0 0.0
        %650 = vmatpush.msra.mxu0 0.0
        %651 = vmatpush.msra.mxu0 0.0
        %652 = vmatpush.msra.mxu0 0.0
        %653 = vmatpush.msra.mxu0 0.0
        %654 = vmatpush.msra.mxu0 0.0
        %655 = vmatpush.msra.mxu0 0.0
        %656 = vmatpush.msra.mxu0 0.0
        %657 = vmatpush.msra.mxu0 %v641
        %658 = vmatpush.msra.mxu0 %v640
        %659 = vmatpush.msra.mxu0 %v639
        %660 = vmatpush.msra.mxu0 %v638
        %661 = vmatmul.f32.gmra.mxu0 %v643
        %v662 = vpop.f32.mrf.mxu0
        %v663 = vadd.f32 0.0, %v662
        %664 = vdwg.mxu0
        %v665 = vmax.f32 %v663, 0.0
        %v666 = vld [vmem:[%s4] sm:$0xff]
        %vm667 = vcmask 64512
        %v669 = vsel %vm667, %v665, 0
        %671 = vmatpush.msra.mxu0 0.0
        %672 = vmatpush.msra.mxu0 0.0
        %673 = vmatpush.msra.mxu0 0.0
        %674 = vmatpush.msra.mxu0 0.0
        %675 = vmatpush.msra.mxu0 0.0
        %676 = vmatpush.msra.mxu0 0.0
        %677 = vmatpush.msra.mxu0 0.0
        %678 = vmatpush.msra.mxu0 0.0
        %679 = vmatpush.msra.mxu0 0.0
        %680 = vmatpush.msra.mxu0 0.0
        %681 = vmatpush.msra.mxu0 0.0
        %682 = vmatpush.msra.mxu0 0.0
        %683 = vmatpush.msra.mxu0 0.0
        %684 = vmatpush.msra.mxu0 0.0
        %685 = vmatpush.msra.mxu0 0.0
        %686 = vmatpush.msra.mxu0 %v666
        %687 = vmatmul.f32.gmra.mxu0 %v669
        %v688 = vpop.f32.mrf.mxu0
        %v689 = vadd.f32 0.0, %v688
        %690 = vdwg.mxu0
        %v691 = vxor.u32 %v689, 2147483648
        %v692 = vmul.f32 %v691, 1.442695
        %v693 = vpow.pop %v692
        %v694 = vadd.f32 %v693, 1.0
        %v695 = vrcp.pop %v694
        %v696 = vmul.f32 %v694, %v695
        %v697 = vsub.f32 1.0, %v696
        %v698 = vmul.f32 %v695, %v697
        %v699 = vadd.f32 %v695, %v698
        %vm700 = vweird.f32 %v694
        %vm701 = vweird.f32 %v695
        %vm702 = vmor %vm700, %vm701
        %v703 = vsel %vm702, %v695, %v699
        %v704 = vand.u32 2147483647, %v694
        %vm705 = vcmp.eq.f32.partialorder %v704, 8.507059e+37
        %v706 = vand.u32 %v694, 2147483648
        %v707 = vor.u32 1.1754944e-38, %v706
        %v708 = vsel %vm705, %v707, %v703
        %v709 = vmul.f32 1.0, %v708
        %v710 = vperm.slane %v709, 0
        %v711 = vmul.f32 %v528, %v710
        %v712 = vmul.f32 %v529, %v710
        %v713 = vmul.f32 %v530, %v710
        %v714 = vmul.f32 %v531, %v710
        %v715 = vmul.f32 %v532, %v710
        %v716 = vmul.f32 %v533, %v710
        %v717 = vmul.f32 %v534, %v710
        %v718 = vmul.f32 %v535, %v710
        %v719 = vmul.f32 %v536, %v710
        %v720 = vmul.f32 %v537, %v710
        %v721 = vmul.f32 %v538, %v710
        %v722 = vmul.f32 %v539, %v710
        %v723 = vmul.f32 %v540, %v710
        %v724 = vmul.f32 %v541, %v710
        %v725 = vmul.f32 %v542, %v710
        %v726 = vmul.f32 %v543, %v710
        %v727 = vmul.f32 %v544, %v710
        %v728 = vmul.f32 %v545, %v710
        %v729 = vmul.f32 %v546, %v710
        %v730 = vmul.f32 %v547, %v710
        %v731 = vmul.f32 %v548, %v710
        %v732 = vmul.f32 %v549, %v710
        %v733 = vmul.f32 %v550, %v710
        %v734 = vmul.f32 %v551, %v710
        %v735 = vmul.f32 %v552, %v710
        %v736 = vmul.f32 %v553, %v710
        %v737 = vmul.f32 %v554, %v710
        %v738 = vmul.f32 %v555, %v710
        %v739 = vmul.f32 %v556, %v710
        %v740 = vmul.f32 %v557, %v710
        %v741 = vmul.f32 %v558, %v710
        %v742 = vmul.f32 %v559, %v710
        %vm775 = vcmask 1040384
        %v776 = vrot.slane %v711, 7
        %v777 = vrot.slane %v712, 7
        %v778 = vsel %vm775, %v776, %v777
        %v779 = vrot.slane %v713, 7
        %v780 = vrot.slane %v714, 7
        %v781 = vsel %vm775, %v779, %v780
        %v782 = vrot.slane %v715, 7
        %v783 = vrot.slane %v716, 7
        %v784 = vsel %vm775, %v782, %v783
        %v785 = vrot.slane %v717, 7
        %v786 = vrot.slane %v718, 7
        %v787 = vsel %vm775, %v785, %v786
        %v788 = vrot.slane %v719, 7
        %v789 = vrot.slane %v720, 7
        %v790 = vsel %vm775, %v788, %v789
        %v791 = vrot.slane %v721, 7
        %v792 = vrot.slane %v722, 7
        %v793 = vsel %vm775, %v791, %v792
        %v794 = vrot.slane %v723, 7
        %v795 = vrot.slane %v724, 7
        %v796 = vsel %vm775, %v794, %v795
        %v797 = vrot.slane %v725, 7
        %v798 = vrot.slane %v726, 7
        %v799 = vsel %vm775, %v797, %v798
        %v800 = vrot.slane %v727, 7
        %v801 = vrot.slane %v728, 7
        %v802 = vsel %vm775, %v800, %v801
        %v803 = vrot.slane %v729, 7
        %v804 = vrot.slane %v730, 7
        %v805 = vsel %vm775, %v803, %v804
        %v806 = vrot.slane %v731, 7
        %v807 = vrot.slane %v732, 7
        %v808 = vsel %vm775, %v806, %v807
        %v809 = vrot.slane %v733, 7
        %v810 = vrot.slane %v734, 7
        %v811 = vsel %vm775, %v809, %v810
        %v812 = vrot.slane %v735, 7
        %v813 = vrot.slane %v736, 7
        %v814 = vsel %vm775, %v812, %v813
        %v815 = vrot.slane %v737, 7
        %v816 = vrot.slane %v738, 7
        %v817 = vsel %vm775, %v815, %v816
        %v818 = vrot.slane %v739, 7
        %v819 = vrot.slane %v740, 7
        %v820 = vsel %vm775, %v818, %v819
        %v821 = vrot.slane %v741, 7
        %v822 = vrot.slane %v742, 7
        %v823 = vsel %vm775, %v821, %v822
        %v872 = vsel %vm775, 0.0, %v776
        %v873 = vsel %vm775, 0.0, %v779
        %v874 = vsel %vm775, 0.0, %v782
        %v875 = vsel %vm775, 0.0, %v785
        %v876 = vsel %vm775, 0.0, %v788
        %v877 = vsel %vm775, 0.0, %v791
        %v878 = vsel %vm775, 0.0, %v794
        %v879 = vsel %vm775, 0.0, %v797
        %v880 = vsel %vm775, 0.0, %v800
        %v881 = vsel %vm775, 0.0, %v803
        %v882 = vsel %vm775, 0.0, %v806
        %v883 = vsel %vm775, 0.0, %v809
        %v884 = vsel %vm775, 0.0, %v812
        %v885 = vsel %vm775, 0.0, %v815
        %v886 = vsel %vm775, 0.0, %v818
        %v887 = vsel %vm775, 0.0, %v821
        %v888 = vsel %vm775, %v777, 0.0
        %v889 = vsel %vm775, %v780, 0.0
        %v890 = vsel %vm775, %v783, 0.0
        %v891 = vsel %vm775, %v786, 0.0
        %v892 = vsel %vm775, %v789, 0.0
        %v893 = vsel %vm775, %v792, 0.0
        %v894 = vsel %vm775, %v795, 0.0
        %v895 = vsel %vm775, %v798, 0.0
        %v896 = vsel %vm775, %v801, 0.0
        %v897 = vsel %vm775, %v804, 0.0
        %v898 = vsel %vm775, %v807, 0.0
        %v899 = vsel %vm775, %v810, 0.0
        %v900 = vsel %vm775, %v813, 0.0
        %v901 = vsel %vm775, %v816, 0.0
        %v902 = vsel %vm775, %v819, 0.0
        %v903 = vsel %vm775, %v822, 0.0
        %s904 = scalar_lea.vmem [#allocation2], 24
        %905 = vst.msk [vmem:[%s904] sm:$0xff] %vm560, %v872
        %906 = vst.msk [vmem:[%s904 + $0x8] sm:$0xff] %vm560, %v778
        %vm907 = vcmask 254976
        %908 = vst.msk [vmem:[%s904 + $0x10] sm:$0x3] %vm907, %v888
        %909 = vst.msk [vmem:[%s904 + $0x18] sm:$0xff] %vm560, %v873
        %910 = vst.msk [vmem:[%s904 + $0x20] sm:$0xff] %vm560, %v781
        %911 = vst.msk [vmem:[%s904 + $0x28] sm:$0x3] %vm907, %v889
        %912 = vst.msk [vmem:[%s904 + $0x30] sm:$0xff] %vm560, %v874
        %913 = vst.msk [vmem:[%s904 + $0x38] sm:$0xff] %vm560, %v784
        %914 = vst.msk [vmem:[%s904 + $0x40] sm:$0x3] %vm907, %v890
        %915 = vst.msk [vmem:[%s904 + $0x48] sm:$0xff] %vm560, %v875
        %916 = vst.msk [vmem:[%s904 + $0x50] sm:$0xff] %vm560, %v787
        %917 = vst.msk [vmem:[%s904 + $0x58] sm:$0x3] %vm907, %v891
        %918 = vst.msk [vmem:[%s904 + $0x60] sm:$0xff] %vm560, %v876
        %919 = vst.msk [vmem:[%s904 + $0x68] sm:$0xff] %vm560, %v790
        %920 = vst.msk [vmem:[%s904 + $0x70] sm:$0x3] %vm907, %v892
        %921 = vst.msk [vmem:[%s904 + $0x78] sm:$0xff] %vm560, %v877
        %922 = vst.msk [vmem:[%s904 + $0x80] sm:$0xff] %vm560, %v793
        %923 = vst.msk [vmem:[%s904 + $0x88] sm:$0x3] %vm907, %v893
        %924 = vst.msk [vmem:[%s904 + $0x90] sm:$0xff] %vm560, %v878
        %925 = vst.msk [vmem:[%s904 + $0x98] sm:$0xff] %vm560, %v796
        %926 = vst.msk [vmem:[%s904 + $0xa0] sm:$0x3] %vm907, %v894
        %927 = vst.msk [vmem:[%s904 + $0xa8] sm:$0xff] %vm560, %v879
        %928 = vst.msk [vmem:[%s904 + $0xb0] sm:$0xff] %vm560, %v799
        %929 = vst.msk [vmem:[%s904 + $0xb8] sm:$0x3] %vm907, %v895
        %930 = vst.msk [vmem:[%s904 + $0xc0] sm:$0xff] %vm560, %v880
        %931 = vst.msk [vmem:[%s904 + $0xc8] sm:$0xff] %vm560, %v802
        %932 = vst.msk [vmem:[%s904 + $0xd0] sm:$0x3] %vm907, %v896
        %933 = vst.msk [vmem:[%s904 + $0xd8] sm:$0xff] %vm560, %v881
        %934 = vst.msk [vmem:[%s904 + $0xe0] sm:$0xff] %vm560, %v805
        %935 = vst.msk [vmem:[%s904 + $0xe8] sm:$0x3] %vm907, %v897
        %936 = vst.msk [vmem:[%s904 + $0xf0] sm:$0xff] %vm560, %v882
        %937 = vst.msk [vmem:[%s904 + $0xf8] sm:$0xff] %vm560, %v808
        %938 = vst.msk [vmem:[%s904 + $0x100] sm:$0x3] %vm907, %v898
        %939 = vst.msk [vmem:[%s904 + $0x108] sm:$0xff] %vm560, %v883
        %940 = vst.msk [vmem:[%s904 + $0x110] sm:$0xff] %vm560, %v811
        %941 = vst.msk [vmem:[%s904 + $0x118] sm:$0x3] %vm907, %v899
        %942 = vst.msk [vmem:[%s904 + $0x120] sm:$0xff] %vm560, %v884
        %943 = vst.msk [vmem:[%s904 + $0x128] sm:$0xff] %vm560, %v814
        %944 = vst.msk [vmem:[%s904 + $0x130] sm:$0x3] %vm907, %v900
        %945 = vst.msk [vmem:[%s904 + $0x138] sm:$0xff] %vm560, %v885
        %946 = vst.msk [vmem:[%s904 + $0x140] sm:$0xff] %vm560, %v817
        %947 = vst.msk [vmem:[%s904 + $0x148] sm:$0x3] %vm907, %v901
        %948 = vst.msk [vmem:[%s904 + $0x150] sm:$0xff] %vm560, %v886
        %949 = vst.msk [vmem:[%s904 + $0x158] sm:$0xff] %vm560, %v820
        %950 = vst.msk [vmem:[%s904 + $0x160] sm:$0x3] %vm907, %v902
        %951 = vst.msk [vmem:[%s904 + $0x168] sm:$0xff] %vm560, %v887
        %952 = vst.msk [vmem:[%s904 + $0x170] sm:$0xff] %vm560, %v823
        %953 = vst.msk [vmem:[%s904 + $0x178] sm:$0x3] %vm907, %v903
        %954 = vst.msk [vmem:[#allocation2] sm:$0xff] %vm560, 0.0
        %955 = vst.msk [vmem:[#allocation2 + $0x8] sm:$0xff] %vm560, 0.0
        %956 = vst.msk [vmem:[#allocation2 + $0x10] sm:$0x3] %vm907, 0.0
        %s957 = scalar_lea.vmem [#allocation2], 408
        %958 = vst.msk [vmem:[%s957] sm:$0xff] %vm560, 0.0
        %959 = vst.msk [vmem:[%s957 + $0x8] sm:$0xff] %vm560, 0.0
        %960 = vst.msk [vmem:[%s957 + $0x10] sm:$0x3] %vm907, 0.0
        %v961 = vld [vmem:[#allocation2] sm:$0xff]
        %v962 = vld [vmem:[#allocation2 + $0x8] sm:$0xff]
        %v963 = vld [vmem:[#allocation2 + $0x18] sm:$0xff]
        %v964 = vld [vmem:[#allocation2 + $0x20] sm:$0xff]
        %v965 = vld [vmem:[#allocation2 + $0x30] sm:$0xff]
        %v966 = vld [vmem:[#allocation2 + $0x38] sm:$0xff]
        %v967 = vld [vmem:[#allocation2 + $0x48] sm:$0xff]
        %v968 = vld [vmem:[#allocation2 + $0x50] sm:$0xff]
        %v969 = vld [vmem:[#allocation2 + $0x60] sm:$0xff]
        %v970 = vld [vmem:[#allocation2 + $0x68] sm:$0xff]
        %v971 = vld [vmem:[#allocation2 + $0x78] sm:$0xff]
        %v972 = vld [vmem:[#allocation2 + $0x80] sm:$0xff]
        %v973 = vld [vmem:[#allocation2 + $0x90] sm:$0xff]
        %v974 = vld [vmem:[#allocation2 + $0x98] sm:$0xff]
        %v975 = vld [vmem:[#allocation2 + $0xa8] sm:$0xff]
        %v976 = vld [vmem:[#allocation2 + $0xb0] sm:$0xff]
        %v977 = vld [vmem:[#allocation2 + $0xc0] sm:$0xff]
        %v978 = vld [vmem:[#allocation2 + $0xc8] sm:$0xff]
        %v979 = vld [vmem:[#allocation2 + $0xd8] sm:$0xff]
        %v980 = vld [vmem:[#allocation2 + $0xe0] sm:$0xff]
        %v981 = vld [vmem:[#allocation2 + $0xf0] sm:$0xff]
        %v982 = vld [vmem:[#allocation2 + $0xf8] sm:$0xff]
        %v983 = vld [vmem:[#allocation2 + $0x108] sm:$0xff]
        %v984 = vld [vmem:[#allocation2 + $0x110] sm:$0xff]
        %v985 = vld [vmem:[#allocation2 + $0x120] sm:$0xff]
        %v986 = vld [vmem:[#allocation2 + $0x128] sm:$0xff]
        %v987 = vld [vmem:[#allocation2 + $0x138] sm:$0xff]
        %v988 = vld [vmem:[#allocation2 + $0x140] sm:$0xff]
        %v989 = vld [vmem:[#allocation2 + $0x150] sm:$0xff]
        %v990 = vld [vmem:[#allocation2 + $0x158] sm:$0xff]
        %v991 = vld [vmem:[#allocation2 + $0x168] sm:$0xff]
        %v992 = vld [vmem:[#allocation2 + $0x170] sm:$0xff]
        %v993 = vld [vmem:[#allocation2 + $0x1] sm:$0xff]
        %v994 = vld [vmem:[#allocation2 + $0x9] sm:$0xff]
        %v995 = vld [vmem:[#allocation2 + $0x19] sm:$0xff]
        %v996 = vld [vmem:[#allocation2 + $0x21] sm:$0xff]
        %v997 = vld [vmem:[#allocation2 + $0x31] sm:$0xff]
        %v998 = vld [vmem:[#allocation2 + $0x39] sm:$0xff]
        %v999 = vld [vmem:[#allocation2 + $0x49] sm:$0xff]
        %v1000 = vld [vmem:[#allocation2 + $0x51] sm:$0xff]
        %v1001 = vld [vmem:[#allocation2 + $0x61] sm:$0xff]
        %v1002 = vld [vmem:[#allocation2 + $0x69] sm:$0xff]
        %v1003 = vld [vmem:[#allocation2 + $0x79] sm:$0xff]
        %v1004 = vld [vmem:[#allocation2 + $0x81] sm:$0xff]
        %v1005 = vld [vmem:[#allocation2 + $0x91] sm:$0xff]
        %v1006 = vld [vmem:[#allocation2 + $0x99] sm:$0xff]
        %v1007 = vld [vmem:[#allocation2 + $0xa9] sm:$0xff]
        %v1008 = vld [vmem:[#allocation2 + $0xb1] sm:$0xff]
        %v1009 = vld [vmem:[#allocation2 + $0xc1] sm:$0xff]
        %v1010 = vld [vmem:[#allocation2 + $0xc9] sm:$0xff]
        %v1011 = vld [vmem:[#allocation2 + $0xd9] sm:$0xff]
        %v1012 = vld [vmem:[#allocation2 + $0xe1] sm:$0xff]
        %v1013 = vld [vmem:[#allocation2 + $0xf1] sm:$0xff]
        %v1014 = vld [vmem:[#allocation2 + $0xf9] sm:$0xff]
        %v1015 = vld [vmem:[#allocation2 + $0x109] sm:$0xff]
        %v1016 = vld [vmem:[#allocation2 + $0x111] sm:$0xff]
        %v1017 = vld [vmem:[#allocation2 + $0x121] sm:$0xff]
        %v1018 = vld [vmem:[#allocation2 + $0x129] sm:$0xff]
        %v1019 = vld [vmem:[#allocation2 + $0x139] sm:$0xff]
        %v1020 = vld [vmem:[#allocation2 + $0x141] sm:$0xff]
        %v1021 = vld [vmem:[#allocation2 + $0x151] sm:$0xff]
        %v1022 = vld [vmem:[#allocation2 + $0x159] sm:$0xff]
        %v1023 = vld [vmem:[#allocation2 + $0x169] sm:$0xff]
        %v1024 = vld [vmem:[#allocation2 + $0x171] sm:$0xff]
        %v1025 = vld [vmem:[#allocation2 + $0x2] sm:$0xff]
        %v1026 = vld [vmem:[#allocation2 + $0xa] sm:$0xff]
        %v1027 = vld [vmem:[#allocation2 + $0x1a] sm:$0xff]
        %v1028 = vld [vmem:[#allocation2 + $0x22] sm:$0xff]
        %v1029 = vld [vmem:[#allocation2 + $0x32] sm:$0xff]
        %v1030 = vld [vmem:[#allocation2 + $0x3a] sm:$0xff]
        %v1031 = vld [vmem:[#allocation2 + $0x4a] sm:$0xff]
        %v1032 = vld [vmem:[#allocation2 + $0x52] sm:$0xff]
        %v1033 = vld [vmem:[#allocation2 + $0x62] sm:$0xff]
        %v1034 = vld [vmem:[#allocation2 + $0x6a] sm:$0xff]
        %v1035 = vld [vmem:[#allocation2 + $0x7a] sm:$0xff]
        %v1036 = vld [vmem:[#allocation2 + $0x82] sm:$0xff]
        %v1037 = vld [vmem:[#allocation2 + $0x92] sm:$0xff]
        %v1038 = vld [vmem:[#allocation2 + $0x9a] sm:$0xff]
        %v1039 = vld [vmem:[#allocation2 + $0xaa] sm:$0xff]
        %v1040 = vld [vmem:[#allocation2 + $0xb2] sm:$0xff]
        %v1041 = vld [vmem:[#allocation2 + $0xc2] sm:$0xff]
        %v1042 = vld [vmem:[#allocation2 + $0xca] sm:$0xff]
        %v1043 = vld [vmem:[#allocation2 + $0xda] sm:$0xff]
        %v1044 = vld [vmem:[#allocation2 + $0xe2] sm:$0xff]
        %v1045 = vld [vmem:[#allocation2 + $0xf2] sm:$0xff]
        %v1046 = vld [vmem:[#allocation2 + $0xfa] sm:$0xff]
        %v1047 = vld [vmem:[#allocation2 + $0x10a] sm:$0xff]
        %v1048 = vld [vmem:[#allocation2 + $0x112] sm:$0xff]
        %v1049 = vld [vmem:[#allocation2 + $0x122] sm:$0xff]
        %v1050 = vld [vmem:[#allocation2 + $0x12a] sm:$0xff]
        %v1051 = vld [vmem:[#allocation2 + $0x13a] sm:$0xff]
        %v1052 = vld [vmem:[#allocation2 + $0x142] sm:$0xff]
        %v1053 = vld [vmem:[#allocation2 + $0x152] sm:$0xff]
        %v1054 = vld [vmem:[#allocation2 + $0x15a] sm:$0xff]
        %v1055 = vld [vmem:[#allocation2 + $0x16a] sm:$0xff]
        %v1056 = vld [vmem:[#allocation2 + $0x172] sm:$0xff]
        %v1057 = vld [vmem:[%s904] sm:$0xff]
        %v1058 = vld [vmem:[%s904 + $0x8] sm:$0xff]
        %v1059 = vld [vmem:[%s904 + $0x18] sm:$0xff]
        %v1060 = vld [vmem:[%s904 + $0x20] sm:$0xff]
        %v1061 = vld [vmem:[%s904 + $0x30] sm:$0xff]
        %v1062 = vld [vmem:[%s904 + $0x38] sm:$0xff]
        %v1063 = vld [vmem:[%s904 + $0x48] sm:$0xff]
        %v1064 = vld [vmem:[%s904 + $0x50] sm:$0xff]
        %v1065 = vld [vmem:[%s904 + $0x60] sm:$0xff]
        %v1066 = vld [vmem:[%s904 + $0x68] sm:$0xff]
        %v1067 = vld [vmem:[%s904 + $0x78] sm:$0xff]
        %v1068 = vld [vmem:[%s904 + $0x80] sm:$0xff]
        %v1069 = vld [vmem:[%s904 + $0x90] sm:$0xff]
        %v1070 = vld [vmem:[%s904 + $0x98] sm:$0xff]
        %v1071 = vld [vmem:[%s904 + $0xa8] sm:$0xff]
        %v1072 = vld [vmem:[%s904 + $0xb0] sm:$0xff]
        %v1073 = vld [vmem:[%s904 + $0xc0] sm:$0xff]
        %v1074 = vld [vmem:[%s904 + $0xc8] sm:$0xff]
        %v1075 = vld [vmem:[%s904 + $0xd8] sm:$0xff]
        %v1076 = vld [vmem:[%s904 + $0xe0] sm:$0xff]
        %v1077 = vld [vmem:[%s904 + $0xf0] sm:$0xff]
        %v1078 = vld [vmem:[%s904 + $0xf8] sm:$0xff]
        %v1079 = vld [vmem:[%s904 + $0x108] sm:$0xff]
        %v1080 = vld [vmem:[%s904 + $0x110] sm:$0xff]
        %v1081 = vld [vmem:[%s904 + $0x120] sm:$0xff]
        %v1082 = vld [vmem:[%s904 + $0x128] sm:$0xff]
        %v1083 = vld [vmem:[%s904 + $0x138] sm:$0xff]
        %v1084 = vld [vmem:[%s904 + $0x140] sm:$0xff]
        %v1085 = vld [vmem:[%s904 + $0x150] sm:$0xff]
        %v1086 = vld [vmem:[%s904 + $0x158] sm:$0xff]
        %v1087 = vld [vmem:[%s904 + $0x168] sm:$0xff]
        %v1088 = vld [vmem:[%s904 + $0x170] sm:$0xff]
        %v1089 = vld [vmem:[%s904 + $0x1] sm:$0xff]
        %v1090 = vld [vmem:[%s904 + $0x9] sm:$0xff]
        %v1091 = vld [vmem:[%s904 + $0x19] sm:$0xff]
        %v1092 = vld [vmem:[%s904 + $0x21] sm:$0xff]
        %v1093 = vld [vmem:[%s904 + $0x31] sm:$0xff]
        %v1094 = vld [vmem:[%s904 + $0x39] sm:$0xff]
        %v1095 = vld [vmem:[%s904 + $0x49] sm:$0xff]
        %v1096 = vld [vmem:[%s904 + $0x51] sm:$0xff]
        %v1097 = vld [vmem:[%s904 + $0x61] sm:$0xff]
        %v1098 = vld [vmem:[%s904 + $0x69] sm:$0xff]
        %v1099 = vld [vmem:[%s904 + $0x79] sm:$0xff]
        %v1100 = vld [vmem:[%s904 + $0x81] sm:$0xff]
        %v1101 = vld [vmem:[%s904 + $0x91] sm:$0xff]
        %v1102 = vld [vmem:[%s904 + $0x99] sm:$0xff]
        %v1103 = vld [vmem:[%s904 + $0xa9] sm:$0xff]
        %v1104 = vld [vmem:[%s904 + $0xb1] sm:$0xff]
        %v1105 = vld [vmem:[%s904 + $0xc1] sm:$0xff]
        %v1106 = vld [vmem:[%s904 + $0xc9] sm:$0xff]
        %v1107 = vld [vmem:[%s904 + $0xd9] sm:$0xff]
        %v1108 = vld [vmem:[%s904 + $0xe1] sm:$0xff]
        %v1109 = vld [vmem:[%s904 + $0xf1] sm:$0xff]
        %v1110 = vld [vmem:[%s904 + $0xf9] sm:$0xff]
        %v1111 = vld [vmem:[%s904 + $0x109] sm:$0xff]
        %v1112 = vld [vmem:[%s904 + $0x111] sm:$0xff]
        %v1113 = vld [vmem:[%s904 + $0x121] sm:$0xff]
        %v1114 = vld [vmem:[%s904 + $0x129] sm:$0xff]
        %v1115 = vld [vmem:[%s904 + $0x139] sm:$0xff]
        %v1116 = vld [vmem:[%s904 + $0x141] sm:$0xff]
        %v1117 = vld [vmem:[%s904 + $0x151] sm:$0xff]
        %v1118 = vld [vmem:[%s904 + $0x159] sm:$0xff]
        %v1119 = vld [vmem:[%s904 + $0x169] sm:$0xff]
        %v1120 = vld [vmem:[%s904 + $0x171] sm:$0xff]
        %v1121 = vld [vmem:[%s904 + $0x2] sm:$0xff]
        %v1122 = vld [vmem:[%s904 + $0xa] sm:$0xff]
        %v1123 = vld [vmem:[%s904 + $0x1a] sm:$0xff]
        %v1124 = vld [vmem:[%s904 + $0x22] sm:$0xff]
        %v1125 = vld [vmem:[%s904 + $0x32] sm:$0xff]
        %v1126 = vld [vmem:[%s904 + $0x3a] sm:$0xff]
        %v1127 = vld [vmem:[%s904 + $0x4a] sm:$0xff]
        %v1128 = vld [vmem:[%s904 + $0x52] sm:$0xff]
        %v1129 = vld [vmem:[%s904 + $0x62] sm:$0xff]
        %v1130 = vld [vmem:[%s904 + $0x6a] sm:$0xff]
        %v1131 = vld [vmem:[%s904 + $0x7a] sm:$0xff]
        %v1132 = vld [vmem:[%s904 + $0x82] sm:$0xff]
        %v1133 = vld [vmem:[%s904 + $0x92] sm:$0xff]
        %v1134 = vld [vmem:[%s904 + $0x9a] sm:$0xff]
        %v1135 = vld [vmem:[%s904 + $0xaa] sm:$0xff]
        %v1136 = vld [vmem:[%s904 + $0xb2] sm:$0xff]
        %v1137 = vld [vmem:[%s904 + $0xc2] sm:$0xff]
        %v1138 = vld [vmem:[%s904 + $0xca] sm:$0xff]
        %v1139 = vld [vmem:[%s904 + $0xda] sm:$0xff]
        %v1140 = vld [vmem:[%s904 + $0xe2] sm:$0xff]
        %v1141 = vld [vmem:[%s904 + $0xf2] sm:$0xff]
        %v1142 = vld [vmem:[%s904 + $0xfa] sm:$0xff]
        %v1143 = vld [vmem:[%s904 + $0x10a] sm:$0xff]
        %v1144 = vld [vmem:[%s904 + $0x112] sm:$0xff]
        %v1145 = vld [vmem:[%s904 + $0x122] sm:$0xff]
        %v1146 = vld [vmem:[%s904 + $0x12a] sm:$0xff]
        %v1147 = vld [vmem:[%s904 + $0x13a] sm:$0xff]
        %v1148 = vld [vmem:[%s904 + $0x142] sm:$0xff]
        %v1149 = vld [vmem:[%s904 + $0x152] sm:$0xff]
        %v1150 = vld [vmem:[%s904 + $0x15a] sm:$0xff]
        %v1151 = vld [vmem:[%s904 + $0x16a] sm:$0xff]
        %v1152 = vld [vmem:[%s904 + $0x172] sm:$0xff]
        %s1153 = scalar_lea.vmem [#allocation2], 48
        %v1154 = vld [vmem:[%s1153] sm:$0xff]
        %v1155 = vld [vmem:[%s1153 + $0x8] sm:$0xff]
        %v1156 = vld [vmem:[%s1153 + $0x18] sm:$0xff]
        %v1157 = vld [vmem:[%s1153 + $0x20] sm:$0xff]
        %v1158 = vld [vmem:[%s1153 + $0x30] sm:$0xff]
        %v1159 = vld [vmem:[%s1153 + $0x38] sm:$0xff]
        %v1160 = vld [vmem:[%s1153 + $0x48] sm:$0xff]
        %v1161 = vld [vmem:[%s1153 + $0x50] sm:$0xff]
        %v1162 = vld [vmem:[%s1153 + $0x60] sm:$0xff]
        %v1163 = vld [vmem:[%s1153 + $0x68] sm:$0xff]
        %v1164 = vld [vmem:[%s1153 + $0x78] sm:$0xff]
        %v1165 = vld [vmem:[%s1153 + $0x80] sm:$0xff]
        %v1166 = vld [vmem:[%s1153 + $0x90] sm:$0xff]
        %v1167 = vld [vmem:[%s1153 + $0x98] sm:$0xff]
        %v1168 = vld [vmem:[%s1153 + $0xa8] sm:$0xff]
        %v1169 = vld [vmem:[%s1153 + $0xb0] sm:$0xff]
        %v1170 = vld [vmem:[%s1153 + $0xc0] sm:$0xff]
        %v1171 = vld [vmem:[%s1153 + $0xc8] sm:$0xff]
        %v1172 = vld [vmem:[%s1153 + $0xd8] sm:$0xff]
        %v1173 = vld [vmem:[%s1153 + $0xe0] sm:$0xff]
        %v1174 = vld [vmem:[%s1153 + $0xf0] sm:$0xff]
        %v1175 = vld [vmem:[%s1153 + $0xf8] sm:$0xff]
        %v1176 = vld [vmem:[%s1153 + $0x108] sm:$0xff]
        %v1177 = vld [vmem:[%s1153 + $0x110] sm:$0xff]
        %v1178 = vld [vmem:[%s1153 + $0x120] sm:$0xff]
        %v1179 = vld [vmem:[%s1153 + $0x128] sm:$0xff]
        %v1180 = vld [vmem:[%s1153 + $0x138] sm:$0xff]
        %v1181 = vld [vmem:[%s1153 + $0x140] sm:$0xff]
        %v1182 = vld [vmem:[%s1153 + $0x150] sm:$0xff]
        %v1183 = vld [vmem:[%s1153 + $0x158] sm:$0xff]
        %v1184 = vld [vmem:[%s1153 + $0x168] sm:$0xff]
        %v1185 = vld [vmem:[%s1153 + $0x170] sm:$0xff]
        %v1186 = vld [vmem:[%s1153 + $0x1] sm:$0xff]
        %v1187 = vld [vmem:[%s1153 + $0x9] sm:$0xff]
        %v1188 = vld [vmem:[%s1153 + $0x19] sm:$0xff]
        %v1189 = vld [vmem:[%s1153 + $0x21] sm:$0xff]
        %v1190 = vld [vmem:[%s1153 + $0x31] sm:$0xff]
        %v1191 = vld [vmem:[%s1153 + $0x39] sm:$0xff]
        %v1192 = vld [vmem:[%s1153 + $0x49] sm:$0xff]
        %v1193 = vld [vmem:[%s1153 + $0x51] sm:$0xff]
        %v1194 = vld [vmem:[%s1153 + $0x61] sm:$0xff]
        %v1195 = vld [vmem:[%s1153 + $0x69] sm:$0xff]
        %v1196 = vld [vmem:[%s1153 + $0x79] sm:$0xff]
        %v1197 = vld [vmem:[%s1153 + $0x81] sm:$0xff]
        %v1198 = vld [vmem:[%s1153 + $0x91] sm:$0xff]
        %v1199 = vld [vmem:[%s1153 + $0x99] sm:$0xff]
        %v1200 = vld [vmem:[%s1153 + $0xa9] sm:$0xff]
        %v1201 = vld [vmem:[%s1153 + $0xb1] sm:$0xff]
        %v1202 = vld [vmem:[%s1153 + $0xc1] sm:$0xff]
        %v1203 = vld [vmem:[%s1153 + $0xc9] sm:$0xff]
        %v1204 = vld [vmem:[%s1153 + $0xd9] sm:$0xff]
        %v1205 = vld [vmem:[%s1153 + $0xe1] sm:$0xff]
        %v1206 = vld [vmem:[%s1153 + $0xf1] sm:$0xff]
        %v1207 = vld [vmem:[%s1153 + $0xf9] sm:$0xff]
        %v1208 = vld [vmem:[%s1153 + $0x109] sm:$0xff]
        %v1209 = vld [vmem:[%s1153 + $0x111] sm:$0xff]
        %v1210 = vld [vmem:[%s1153 + $0x121] sm:$0xff]
        %v1211 = vld [vmem:[%s1153 + $0x129] sm:$0xff]
        %v1212 = vld [vmem:[%s1153 + $0x139] sm:$0xff]
        %v1213 = vld [vmem:[%s1153 + $0x141] sm:$0xff]
        %v1214 = vld [vmem:[%s1153 + $0x151] sm:$0xff]
        %v1215 = vld [vmem:[%s1153 + $0x159] sm:$0xff]
        %v1216 = vld [vmem:[%s1153 + $0x169] sm:$0xff]
        %v1217 = vld [vmem:[%s1153 + $0x171] sm:$0xff]
        %v1218 = vld [vmem:[%s1153 + $0x2] sm:$0xff]
        %v1219 = vld [vmem:[%s1153 + $0xa] sm:$0xff]
        %v1220 = vld [vmem:[%s1153 + $0x1a] sm:$0xff]
        %v1221 = vld [vmem:[%s1153 + $0x22] sm:$0xff]
        %v1222 = vld [vmem:[%s1153 + $0x32] sm:$0xff]
        %v1223 = vld [vmem:[%s1153 + $0x3a] sm:$0xff]
        %v1224 = vld [vmem:[%s1153 + $0x4a] sm:$0xff]
        %v1225 = vld [vmem:[%s1153 + $0x52] sm:$0xff]
        %v1226 = vld [vmem:[%s1153 + $0x62] sm:$0xff]
        %v1227 = vld [vmem:[%s1153 + $0x6a] sm:$0xff]
        %v1228 = vld [vmem:[%s1153 + $0x7a] sm:$0xff]
        %v1229 = vld [vmem:[%s1153 + $0x82] sm:$0xff]
        %v1230 = vld [vmem:[%s1153 + $0x92] sm:$0xff]
        %v1231 = vld [vmem:[%s1153 + $0x9a] sm:$0xff]
        %v1232 = vld [vmem:[%s1153 + $0xaa] sm:$0xff]
        %v1233 = vld [vmem:[%s1153 + $0xb2] sm:$0xff]
        %v1234 = vld [vmem:[%s1153 + $0xc2] sm:$0xff]
        %v1235 = vld [vmem:[%s1153 + $0xca] sm:$0xff]
        %v1236 = vld [vmem:[%s1153 + $0xda] sm:$0xff]
        %v1237 = vld [vmem:[%s1153 + $0xe2] sm:$0xff]
        %v1238 = vld [vmem:[%s1153 + $0xf2] sm:$0xff]
        %v1239 = vld [vmem:[%s1153 + $0xfa] sm:$0xff]
        %v1240 = vld [vmem:[%s1153 + $0x10a] sm:$0xff]
        %v1241 = vld [vmem:[%s1153 + $0x112] sm:$0xff]
        %v1242 = vld [vmem:[%s1153 + $0x122] sm:$0xff]
        %v1243 = vld [vmem:[%s1153 + $0x12a] sm:$0xff]
        %v1244 = vld [vmem:[%s1153 + $0x13a] sm:$0xff]
        %v1245 = vld [vmem:[%s1153 + $0x142] sm:$0xff]
        %v1246 = vld [vmem:[%s1153 + $0x152] sm:$0xff]
        %v1247 = vld [vmem:[%s1153 + $0x15a] sm:$0xff]
        %v1248 = vld [vmem:[%s1153 + $0x16a] sm:$0xff]
        %v1249 = vld [vmem:[%s1153 + $0x172] sm:$0xff]
        %1282 = vrot.lane.b32.xlu0 %v993, 32
        %v1283 = vpop.permute.xlu0 %1282
        %1284 = vrot.lane.b32.xlu0 %v994, 32
        %v1285 = vpop.permute.xlu0 %1284
        %1286 = vrot.lane.b32.xlu0 %v995, 32
        %v1287 = vpop.permute.xlu0 %1286
        %1288 = vrot.lane.b32.xlu0 %v996, 32
        %v1289 = vpop.permute.xlu0 %1288
        %1290 = vrot.lane.b32.xlu0 %v997, 32
        %v1291 = vpop.permute.xlu0 %1290
        %1292 = vrot.lane.b32.xlu0 %v998, 32
        %v1293 = vpop.permute.xlu0 %1292
        %1294 = vrot.lane.b32.xlu0 %v999, 32
        %v1295 = vpop.permute.xlu0 %1294
        %1296 = vrot.lane.b32.xlu0 %v1000, 32
        %v1297 = vpop.permute.xlu0 %1296
        %1298 = vrot.lane.b32.xlu0 %v1001, 32
        %v1299 = vpop.permute.xlu0 %1298
        %1300 = vrot.lane.b32.xlu0 %v1002, 32
        %v1301 = vpop.permute.xlu0 %1300
        %1302 = vrot.lane.b32.xlu0 %v1003, 32
        %v1303 = vpop.permute.xlu0 %1302
        %1304 = vrot.lane.b32.xlu0 %v1004, 32
        %v1305 = vpop.permute.xlu0 %1304
        %1306 = vrot.lane.b32.xlu0 %v1005, 32
        %v1307 = vpop.permute.xlu0 %1306
        %1308 = vrot.lane.b32.xlu0 %v1006, 32
        %v1309 = vpop.permute.xlu0 %1308
        %1310 = vrot.lane.b32.xlu0 %v1007, 32
        %v1311 = vpop.permute.xlu0 %1310
        %1312 = vrot.lane.b32.xlu0 %v1008, 32
        %v1313 = vpop.permute.xlu0 %1312
        %1314 = vrot.lane.b32.xlu0 %v1009, 32
        %v1315 = vpop.permute.xlu0 %1314
        %1316 = vrot.lane.b32.xlu0 %v1010, 32
        %v1317 = vpop.permute.xlu0 %1316
        %1318 = vrot.lane.b32.xlu0 %v1011, 32
        %v1319 = vpop.permute.xlu0 %1318
        %1320 = vrot.lane.b32.xlu0 %v1012, 32
        %v1321 = vpop.permute.xlu0 %1320
        %1322 = vrot.lane.b32.xlu0 %v1013, 32
        %v1323 = vpop.permute.xlu0 %1322
        %1324 = vrot.lane.b32.xlu0 %v1014, 32
        %v1325 = vpop.permute.xlu0 %1324
        %1326 = vrot.lane.b32.xlu0 %v1015, 32
        %v1327 = vpop.permute.xlu0 %1326
        %1328 = vrot.lane.b32.xlu0 %v1016, 32
        %v1329 = vpop.permute.xlu0 %1328
        %1330 = vrot.lane.b32.xlu0 %v1017, 32
        %v1331 = vpop.permute.xlu0 %1330
        %1332 = vrot.lane.b32.xlu0 %v1018, 32
        %v1333 = vpop.permute.xlu0 %1332
        %1334 = vrot.lane.b32.xlu0 %v1019, 32
        %v1335 = vpop.permute.xlu0 %1334
        %1336 = vrot.lane.b32.xlu0 %v1020, 32
        %v1337 = vpop.permute.xlu0 %1336
        %1338 = vrot.lane.b32.xlu0 %v1021, 32
        %v1339 = vpop.permute.xlu0 %1338
        %1340 = vrot.lane.b32.xlu0 %v1022, 32
        %v1341 = vpop.permute.xlu0 %1340
        %1342 = vrot.lane.b32.xlu0 %v1023, 32
        %v1343 = vpop.permute.xlu0 %1342
        %1344 = vrot.lane.b32.xlu0 %v1024, 32
        %v1345 = vpop.permute.xlu0 %1344
        %1410 = vrot.lane.b32.xlu0 %v1025, 64
        %v1411 = vpop.permute.xlu0 %1410
        %1412 = vrot.lane.b32.xlu0 %v1026, 64
        %v1413 = vpop.permute.xlu0 %1412
        %1414 = vrot.lane.b32.xlu0 %v1027, 64
        %v1415 = vpop.permute.xlu0 %1414
        %1416 = vrot.lane.b32.xlu0 %v1028, 64
        %v1417 = vpop.permute.xlu0 %1416
        %1418 = vrot.lane.b32.xlu0 %v1029, 64
        %v1419 = vpop.permute.xlu0 %1418
        %1420 = vrot.lane.b32.xlu0 %v1030, 64
        %v1421 = vpop.permute.xlu0 %1420
        %1422 = vrot.lane.b32.xlu0 %v1031, 64
        %v1423 = vpop.permute.xlu0 %1422
        %1424 = vrot.lane.b32.xlu0 %v1032, 64
        %v1425 = vpop.permute.xlu0 %1424
        %1426 = vrot.lane.b32.xlu0 %v1033, 64
        %v1427 = vpop.permute.xlu0 %1426
        %1428 = vrot.lane.b32.xlu0 %v1034, 64
        %v1429 = vpop.permute.xlu0 %1428
        %1430 = vrot.lane.b32.xlu0 %v1035, 64
        %v1431 = vpop.permute.xlu0 %1430
        %1432 = vrot.lane.b32.xlu0 %v1036, 64
        %v1433 = vpop.permute.xlu0 %1432
        %1434 = vrot.lane.b32.xlu0 %v1037, 64
        %v1435 = vpop.permute.xlu0 %1434
        %1436 = vrot.lane.b32.xlu0 %v1038, 64
        %v1437 = vpop.permute.xlu0 %1436
        %1438 = vrot.lane.b32.xlu0 %v1039, 64
        %v1439 = vpop.permute.xlu0 %1438
        %1440 = vrot.lane.b32.xlu0 %v1040, 64
        %v1441 = vpop.permute.xlu0 %1440
        %1442 = vrot.lane.b32.xlu0 %v1041, 64
        %v1443 = vpop.permute.xlu0 %1442
        %1444 = vrot.lane.b32.xlu0 %v1042, 64
        %v1445 = vpop.permute.xlu0 %1444
        %1446 = vrot.lane.b32.xlu0 %v1043, 64
        %v1447 = vpop.permute.xlu0 %1446
        %1448 = vrot.lane.b32.xlu0 %v1044, 64
        %v1449 = vpop.permute.xlu0 %1448
        %1450 = vrot.lane.b32.xlu0 %v1045, 64
        %v1451 = vpop.permute.xlu0 %1450
        %1452 = vrot.lane.b32.xlu0 %v1046, 64
        %v1453 = vpop.permute.xlu0 %1452
        %1454 = vrot.lane.b32.xlu0 %v1047, 64
        %v1455 = vpop.permute.xlu0 %1454
        %1456 = vrot.lane.b32.xlu0 %v1048, 64
        %v1457 = vpop.permute.xlu0 %1456
        %1458 = vrot.lane.b32.xlu0 %v1049, 64
        %v1459 = vpop.permute.xlu0 %1458
        %1460 = vrot.lane.b32.xlu0 %v1050, 64
        %v1461 = vpop.permute.xlu0 %1460
        %1462 = vrot.lane.b32.xlu0 %v1051, 64
        %v1463 = vpop.permute.xlu0 %1462
        %1464 = vrot.lane.b32.xlu0 %v1052, 64
        %v1465 = vpop.permute.xlu0 %1464
        %1466 = vrot.lane.b32.xlu0 %v1053, 64
        %v1467 = vpop.permute.xlu0 %1466
        %1468 = vrot.lane.b32.xlu0 %v1054, 64
        %v1469 = vpop.permute.xlu0 %1468
        %1470 = vrot.lane.b32.xlu0 %v1055, 64
        %v1471 = vpop.permute.xlu0 %1470
        %1472 = vrot.lane.b32.xlu0 %v1056, 64
        %v1473 = vpop.permute.xlu0 %1472
        %1538 = vrot.lane.b32.xlu0 %v1057, 96
        %v1539 = vpop.permute.xlu0 %1538
        %1540 = vrot.lane.b32.xlu0 %v1058, 96
        %v1541 = vpop.permute.xlu0 %1540
        %1542 = vrot.lane.b32.xlu0 %v1059, 96
        %v1543 = vpop.permute.xlu0 %1542
        %1544 = vrot.lane.b32.xlu0 %v1060, 96
        %v1545 = vpop.permute.xlu0 %1544
        %1546 = vrot.lane.b32.xlu0 %v1061, 96
        %v1547 = vpop.permute.xlu0 %1546
        %1548 = vrot.lane.b32.xlu0 %v1062, 96
        %v1549 = vpop.permute.xlu0 %1548
        %1550 = vrot.lane.b32.xlu0 %v1063, 96
        %v1551 = vpop.permute.xlu0 %1550
        %1552 = vrot.lane.b32.xlu0 %v1064, 96
        %v1553 = vpop.permute.xlu0 %1552
        %1554 = vrot.lane.b32.xlu0 %v1065, 96
        %v1555 = vpop.permute.xlu0 %1554
        %1556 = vrot.lane.b32.xlu0 %v1066, 96
        %v1557 = vpop.permute.xlu0 %1556
        %1558 = vrot.lane.b32.xlu0 %v1067, 96
        %v1559 = vpop.permute.xlu0 %1558
        %1560 = vrot.lane.b32.xlu0 %v1068, 96
        %v1561 = vpop.permute.xlu0 %1560
        %1562 = vrot.lane.b32.xlu0 %v1069, 96
        %v1563 = vpop.permute.xlu0 %1562
        %1564 = vrot.lane.b32.xlu0 %v1070, 96
        %v1565 = vpop.permute.xlu0 %1564
        %1566 = vrot.lane.b32.xlu0 %v1071, 96
        %v1567 = vpop.permute.xlu0 %1566
        %1568 = vrot.lane.b32.xlu0 %v1072, 96
        %v1569 = vpop.permute.xlu0 %1568
        %1570 = vrot.lane.b32.xlu0 %v1073, 96
        %v1571 = vpop.permute.xlu0 %1570
        %1572 = vrot.lane.b32.xlu0 %v1074, 96
        %v1573 = vpop.permute.xlu0 %1572
        %1574 = vrot.lane.b32.xlu0 %v1075, 96
        %v1575 = vpop.permute.xlu0 %1574
        %1576 = vrot.lane.b32.xlu0 %v1076, 96
        %v1577 = vpop.permute.xlu0 %1576
        %1578 = vrot.lane.b32.xlu0 %v1077, 96
        %v1579 = vpop.permute.xlu0 %1578
        %1580 = vrot.lane.b32.xlu0 %v1078, 96
        %v1581 = vpop.permute.xlu0 %1580
        %1582 = vrot.lane.b32.xlu0 %v1079, 96
        %v1583 = vpop.permute.xlu0 %1582
        %1584 = vrot.lane.b32.xlu0 %v1080, 96
        %v1585 = vpop.permute.xlu0 %1584
        %1586 = vrot.lane.b32.xlu0 %v1081, 96
        %v1587 = vpop.permute.xlu0 %1586
        %1588 = vrot.lane.b32.xlu0 %v1082, 96
        %v1589 = vpop.permute.xlu0 %1588
        %1590 = vrot.lane.b32.xlu0 %v1083, 96
        %v1591 = vpop.permute.xlu0 %1590
        %1592 = vrot.lane.b32.xlu0 %v1084, 96
        %v1593 = vpop.permute.xlu0 %1592
        %1594 = vrot.lane.b32.xlu0 %v1085, 96
        %v1595 = vpop.permute.xlu0 %1594
        %1596 = vrot.lane.b32.xlu0 %v1086, 96
        %v1597 = vpop.permute.xlu0 %1596
        %1598 = vrot.lane.b32.xlu0 %v1087, 96
        %v1599 = vpop.permute.xlu0 %1598
        %1600 = vrot.lane.b32.xlu0 %v1088, 96
        %v1601 = vpop.permute.xlu0 %1600
        %1666 = vrot.lane.b32.xlu0 %v1121, 32
        %v1667 = vpop.permute.xlu0 %1666
        %1668 = vrot.lane.b32.xlu0 %v1122, 32
        %v1669 = vpop.permute.xlu0 %1668
        %1670 = vrot.lane.b32.xlu0 %v1123, 32
        %v1671 = vpop.permute.xlu0 %1670
        %1672 = vrot.lane.b32.xlu0 %v1124, 32
        %v1673 = vpop.permute.xlu0 %1672
        %1674 = vrot.lane.b32.xlu0 %v1125, 32
        %v1675 = vpop.permute.xlu0 %1674
        %1676 = vrot.lane.b32.xlu0 %v1126, 32
        %v1677 = vpop.permute.xlu0 %1676
        %1678 = vrot.lane.b32.xlu0 %v1127, 32
        %v1679 = vpop.permute.xlu0 %1678
        %1680 = vrot.lane.b32.xlu0 %v1128, 32
        %v1681 = vpop.permute.xlu0 %1680
        %1682 = vrot.lane.b32.xlu0 %v1129, 32
        %v1683 = vpop.permute.xlu0 %1682
        %1684 = vrot.lane.b32.xlu0 %v1130, 32
        %v1685 = vpop.permute.xlu0 %1684
        %1686 = vrot.lane.b32.xlu0 %v1131, 32
        %v1687 = vpop.permute.xlu0 %1686
        %1688 = vrot.lane.b32.xlu0 %v1132, 32
        %v1689 = vpop.permute.xlu0 %1688
        %1690 = vrot.lane.b32.xlu0 %v1133, 32
        %v1691 = vpop.permute.xlu0 %1690
        %1692 = vrot.lane.b32.xlu0 %v1134, 32
        %v1693 = vpop.permute.xlu0 %1692
        %1694 = vrot.lane.b32.xlu0 %v1135, 32
        %v1695 = vpop.permute.xlu0 %1694
        %1696 = vrot.lane.b32.xlu0 %v1136, 32
        %v1697 = vpop.permute.xlu0 %1696
        %1698 = vrot.lane.b32.xlu0 %v1137, 32
        %v1699 = vpop.permute.xlu0 %1698
        %1700 = vrot.lane.b32.xlu0 %v1138, 32
        %v1701 = vpop.permute.xlu0 %1700
        %1702 = vrot.lane.b32.xlu0 %v1139, 32
        %v1703 = vpop.permute.xlu0 %1702
        %1704 = vrot.lane.b32.xlu0 %v1140, 32
        %v1705 = vpop.permute.xlu0 %1704
        %1706 = vrot.lane.b32.xlu0 %v1141, 32
        %v1707 = vpop.permute.xlu0 %1706
        %1708 = vrot.lane.b32.xlu0 %v1142, 32
        %v1709 = vpop.permute.xlu0 %1708
        %1710 = vrot.lane.b32.xlu0 %v1143, 32
        %v1711 = vpop.permute.xlu0 %1710
        %1712 = vrot.lane.b32.xlu0 %v1144, 32
        %v1713 = vpop.permute.xlu0 %1712
        %1714 = vrot.lane.b32.xlu0 %v1145, 32
        %v1715 = vpop.permute.xlu0 %1714
        %1716 = vrot.lane.b32.xlu0 %v1146, 32
        %v1717 = vpop.permute.xlu0 %1716
        %1718 = vrot.lane.b32.xlu0 %v1147, 32
        %v1719 = vpop.permute.xlu0 %1718
        %1720 = vrot.lane.b32.xlu0 %v1148, 32
        %v1721 = vpop.permute.xlu0 %1720
        %1722 = vrot.lane.b32.xlu0 %v1149, 32
        %v1723 = vpop.permute.xlu0 %1722
        %1724 = vrot.lane.b32.xlu0 %v1150, 32
        %v1725 = vpop.permute.xlu0 %1724
        %1726 = vrot.lane.b32.xlu0 %v1151, 32
        %v1727 = vpop.permute.xlu0 %1726
        %1728 = vrot.lane.b32.xlu0 %v1152, 32
        %v1729 = vpop.permute.xlu0 %1728
        %1794 = vrot.lane.b32.xlu0 %v1154, 64
        %v1795 = vpop.permute.xlu0 %1794
        %1796 = vrot.lane.b32.xlu0 %v1155, 64
        %v1797 = vpop.permute.xlu0 %1796
        %1798 = vrot.lane.b32.xlu0 %v1156, 64
        %v1799 = vpop.permute.xlu0 %1798
        %1800 = vrot.lane.b32.xlu0 %v1157, 64
        %v1801 = vpop.permute.xlu0 %1800
        %1802 = vrot.lane.b32.xlu0 %v1158, 64
        %v1803 = vpop.permute.xlu0 %1802
        %1804 = vrot.lane.b32.xlu0 %v1159, 64
        %v1805 = vpop.permute.xlu0 %1804
        %1806 = vrot.lane.b32.xlu0 %v1160, 64
        %v1807 = vpop.permute.xlu0 %1806
        %1808 = vrot.lane.b32.xlu0 %v1161, 64
        %v1809 = vpop.permute.xlu0 %1808
        %1810 = vrot.lane.b32.xlu0 %v1162, 64
        %v1811 = vpop.permute.xlu0 %1810
        %1812 = vrot.lane.b32.xlu0 %v1163, 64
        %v1813 = vpop.permute.xlu0 %1812
        %1814 = vrot.lane.b32.xlu0 %v1164, 64
        %v1815 = vpop.permute.xlu0 %1814
        %1816 = vrot.lane.b32.xlu0 %v1165, 64
        %v1817 = vpop.permute.xlu0 %1816
        %1818 = vrot.lane.b32.xlu0 %v1166, 64
        %v1819 = vpop.permute.xlu0 %1818
        %1820 = vrot.lane.b32.xlu0 %v1167, 64
        %v1821 = vpop.permute.xlu0 %1820
        %1822 = vrot.lane.b32.xlu0 %v1168, 64
        %v1823 = vpop.permute.xlu0 %1822
        %1824 = vrot.lane.b32.xlu0 %v1169, 64
        %v1825 = vpop.permute.xlu0 %1824
        %1826 = vrot.lane.b32.xlu0 %v1170, 64
        %v1827 = vpop.permute.xlu0 %1826
        %1828 = vrot.lane.b32.xlu0 %v1171, 64
        %v1829 = vpop.permute.xlu0 %1828
        %1830 = vrot.lane.b32.xlu0 %v1172, 64
        %v1831 = vpop.permute.xlu0 %1830
        %1832 = vrot.lane.b32.xlu0 %v1173, 64
        %v1833 = vpop.permute.xlu0 %1832
        %1834 = vrot.lane.b32.xlu0 %v1174, 64
        %v1835 = vpop.permute.xlu0 %1834
        %1836 = vrot.lane.b32.xlu0 %v1175, 64
        %v1837 = vpop.permute.xlu0 %1836
        %1838 = vrot.lane.b32.xlu0 %v1176, 64
        %v1839 = vpop.permute.xlu0 %1838
        %1840 = vrot.lane.b32.xlu0 %v1177, 64
        %v1841 = vpop.permute.xlu0 %1840
        %1842 = vrot.lane.b32.xlu0 %v1178, 64
        %v1843 = vpop.permute.xlu0 %1842
        %1844 = vrot.lane.b32.xlu0 %v1179, 64
        %v1845 = vpop.permute.xlu0 %1844
        %1846 = vrot.lane.b32.xlu0 %v1180, 64
        %v1847 = vpop.permute.xlu0 %1846
        %1848 = vrot.lane.b32.xlu0 %v1181, 64
        %v1849 = vpop.permute.xlu0 %1848
        %1850 = vrot.lane.b32.xlu0 %v1182, 64
        %v1851 = vpop.permute.xlu0 %1850
        %1852 = vrot.lane.b32.xlu0 %v1183, 64
        %v1853 = vpop.permute.xlu0 %1852
        %1854 = vrot.lane.b32.xlu0 %v1184, 64
        %v1855 = vpop.permute.xlu0 %1854
        %1856 = vrot.lane.b32.xlu0 %v1185, 64
        %v1857 = vpop.permute.xlu0 %1856
        %1922 = vrot.lane.b32.xlu0 %v1186, 96
        %v1923 = vpop.permute.xlu0 %1922
        %1924 = vrot.lane.b32.xlu0 %v1187, 96
        %v1925 = vpop.permute.xlu0 %1924
        %1926 = vrot.lane.b32.xlu0 %v1188, 96
        %v1927 = vpop.permute.xlu0 %1926
        %1928 = vrot.lane.b32.xlu0 %v1189, 96
        %v1929 = vpop.permute.xlu0 %1928
        %1930 = vrot.lane.b32.xlu0 %v1190, 96
        %v1931 = vpop.permute.xlu0 %1930
        %1932 = vrot.lane.b32.xlu0 %v1191, 96
        %v1933 = vpop.permute.xlu0 %1932
        %1934 = vrot.lane.b32.xlu0 %v1192, 96
        %v1935 = vpop.permute.xlu0 %1934
        %1936 = vrot.lane.b32.xlu0 %v1193, 96
        %v1937 = vpop.permute.xlu0 %1936
        %1938 = vrot.lane.b32.xlu0 %v1194, 96
        %v1939 = vpop.permute.xlu0 %1938
        %1940 = vrot.lane.b32.xlu0 %v1195, 96
        %v1941 = vpop.permute.xlu0 %1940
        %1942 = vrot.lane.b32.xlu0 %v1196, 96
        %v1943 = vpop.permute.xlu0 %1942
        %1944 = vrot.lane.b32.xlu0 %v1197, 96
        %v1945 = vpop.permute.xlu0 %1944
        %1946 = vrot.lane.b32.xlu0 %v1198, 96
        %v1947 = vpop.permute.xlu0 %1946
        %1948 = vrot.lane.b32.xlu0 %v1199, 96
        %v1949 = vpop.permute.xlu0 %1948
        %1950 = vrot.lane.b32.xlu0 %v1200, 96
        %v1951 = vpop.permute.xlu0 %1950
        %1952 = vrot.lane.b32.xlu0 %v1201, 96
        %v1953 = vpop.permute.xlu0 %1952
        %1954 = vrot.lane.b32.xlu0 %v1202, 96
        %v1955 = vpop.permute.xlu0 %1954
        %1956 = vrot.lane.b32.xlu0 %v1203, 96
        %v1957 = vpop.permute.xlu0 %1956
        %1958 = vrot.lane.b32.xlu0 %v1204, 96
        %v1959 = vpop.permute.xlu0 %1958
        %1960 = vrot.lane.b32.xlu0 %v1205, 96
        %v1961 = vpop.permute.xlu0 %1960
        %1962 = vrot.lane.b32.xlu0 %v1206, 96
        %v1963 = vpop.permute.xlu0 %1962
        %1964 = vrot.lane.b32.xlu0 %v1207, 96
        %v1965 = vpop.permute.xlu0 %1964
        %1966 = vrot.lane.b32.xlu0 %v1208, 96
        %v1967 = vpop.permute.xlu0 %1966
        %1968 = vrot.lane.b32.xlu0 %v1209, 96
        %v1969 = vpop.permute.xlu0 %1968
        %1970 = vrot.lane.b32.xlu0 %v1210, 96
        %v1971 = vpop.permute.xlu0 %1970
        %1972 = vrot.lane.b32.xlu0 %v1211, 96
        %v1973 = vpop.permute.xlu0 %1972
        %1974 = vrot.lane.b32.xlu0 %v1212, 96
        %v1975 = vpop.permute.xlu0 %1974
        %1976 = vrot.lane.b32.xlu0 %v1213, 96
        %v1977 = vpop.permute.xlu0 %1976
        %1978 = vrot.lane.b32.xlu0 %v1214, 96
        %v1979 = vpop.permute.xlu0 %1978
        %1980 = vrot.lane.b32.xlu0 %v1215, 96
        %v1981 = vpop.permute.xlu0 %1980
        %1982 = vrot.lane.b32.xlu0 %v1216, 96
        %v1983 = vpop.permute.xlu0 %1982
        %1984 = vrot.lane.b32.xlu0 %v1217, 96
        %v1985 = vpop.permute.xlu0 %1984
        %v2018 = vsel %vm560, %v961, %v1283
        %v2019 = vsel %vm560, %v962, %v1285
        %v2020 = vsel %vm560, %v963, %v1287
        %v2021 = vsel %vm560, %v964, %v1289
        %v2022 = vsel %vm560, %v965, %v1291
        %v2023 = vsel %vm560, %v966, %v1293
        %v2024 = vsel %vm560, %v967, %v1295
        %v2025 = vsel %vm560, %v968, %v1297
        %v2026 = vsel %vm560, %v969, %v1299
        %v2027 = vsel %vm560, %v970, %v1301
        %v2028 = vsel %vm560, %v971, %v1303
        %v2029 = vsel %vm560, %v972, %v1305
        %v2030 = vsel %vm560, %v973, %v1307
        %v2031 = vsel %vm560, %v974, %v1309
        %v2032 = vsel %vm560, %v975, %v1311
        %v2033 = vsel %vm560, %v976, %v1313
        %v2034 = vsel %vm560, %v977, %v1315
        %v2035 = vsel %vm560, %v978, %v1317
        %v2036 = vsel %vm560, %v979, %v1319
        %v2037 = vsel %vm560, %v980, %v1321
        %v2038 = vsel %vm560, %v981, %v1323
        %v2039 = vsel %vm560, %v982, %v1325
        %v2040 = vsel %vm560, %v983, %v1327
        %v2041 = vsel %vm560, %v984, %v1329
        %v2042 = vsel %vm560, %v985, %v1331
        %v2043 = vsel %vm560, %v986, %v1333
        %v2044 = vsel %vm560, %v987, %v1335
        %v2045 = vsel %vm560, %v988, %v1337
        %v2046 = vsel %vm560, %v989, %v1339
        %v2047 = vsel %vm560, %v990, %v1341
        %v2048 = vsel %vm560, %v991, %v1343
        %v2049 = vsel %vm560, %v992, %v1345
        %vm2050 = vcmask 523264
        %v2051 = vsel %vm2050, %v2018, %v1411
        %v2052 = vsel %vm2050, %v2019, %v1413
        %v2053 = vsel %vm2050, %v2020, %v1415
        %v2054 = vsel %vm2050, %v2021, %v1417
        %v2055 = vsel %vm2050, %v2022, %v1419
        %v2056 = vsel %vm2050, %v2023, %v1421
        %v2057 = vsel %vm2050, %v2024, %v1423
        %v2058 = vsel %vm2050, %v2025, %v1425
        %v2059 = vsel %vm2050, %v2026, %v1427
        %v2060 = vsel %vm2050, %v2027, %v1429
        %v2061 = vsel %vm2050, %v2028, %v1431
        %v2062 = vsel %vm2050, %v2029, %v1433
        %v2063 = vsel %vm2050, %v2030, %v1435
        %v2064 = vsel %vm2050, %v2031, %v1437
        %v2065 = vsel %vm2050, %v2032, %v1439
        %v2066 = vsel %vm2050, %v2033, %v1441
        %v2067 = vsel %vm2050, %v2034, %v1443
        %v2068 = vsel %vm2050, %v2035, %v1445
        %v2069 = vsel %vm2050, %v2036, %v1447
        %v2070 = vsel %vm2050, %v2037, %v1449
        %v2071 = vsel %vm2050, %v2038, %v1451
        %v2072 = vsel %vm2050, %v2039, %v1453
        %v2073 = vsel %vm2050, %v2040, %v1455
        %v2074 = vsel %vm2050, %v2041, %v1457
        %v2075 = vsel %vm2050, %v2042, %v1459
        %v2076 = vsel %vm2050, %v2043, %v1461
        %v2077 = vsel %vm2050, %v2044, %v1463
        %v2078 = vsel %vm2050, %v2045, %v1465
        %v2079 = vsel %vm2050, %v2046, %v1467
        %v2080 = vsel %vm2050, %v2047, %v1469
        %v2081 = vsel %vm2050, %v2048, %v1471
        %v2082 = vsel %vm2050, %v2049, %v1473
        %vm2083 = vcmask 785408
        %v2084 = vsel %vm2083, %v2051, %v1539
        %v2085 = vsel %vm2083, %v2052, %v1541
        %v2086 = vsel %vm2083, %v2053, %v1543
        %v2087 = vsel %vm2083, %v2054, %v1545
        %v2088 = vsel %vm2083, %v2055, %v1547
        %v2089 = vsel %vm2083, %v2056, %v1549
        %v2090 = vsel %vm2083, %v2057, %v1551
        %v2091 = vsel %vm2083, %v2058, %v1553
        %v2092 = vsel %vm2083, %v2059, %v1555
        %v2093 = vsel %vm2083, %v2060, %v1557
        %v2094 = vsel %vm2083, %v2061, %v1559
        %v2095 = vsel %vm2083, %v2062, %v1561
        %v2096 = vsel %vm2083, %v2063, %v1563
        %v2097 = vsel %vm2083, %v2064, %v1565
        %v2098 = vsel %vm2083, %v2065, %v1567
        %v2099 = vsel %vm2083, %v2066, %v1569
        %v2100 = vsel %vm2083, %v2067, %v1571
        %v2101 = vsel %vm2083, %v2068, %v1573
        %v2102 = vsel %vm2083, %v2069, %v1575
        %v2103 = vsel %vm2083, %v2070, %v1577
        %v2104 = vsel %vm2083, %v2071, %v1579
        %v2105 = vsel %vm2083, %v2072, %v1581
        %v2106 = vsel %vm2083, %v2073, %v1583
        %v2107 = vsel %vm2083, %v2074, %v1585
        %v2108 = vsel %vm2083, %v2075, %v1587
        %v2109 = vsel %vm2083, %v2076, %v1589
        %v2110 = vsel %vm2083, %v2077, %v1591
        %v2111 = vsel %vm2083, %v2078, %v1593
        %v2112 = vsel %vm2083, %v2079, %v1595
        %v2113 = vsel %vm2083, %v2080, %v1597
        %v2114 = vsel %vm2083, %v2081, %v1599
        %v2115 = vsel %vm2083, %v2082, %v1601
        %v2116 = vsel %vm560, %v1089, %v1667
        %v2117 = vsel %vm560, %v1090, %v1669
        %v2118 = vsel %vm560, %v1091, %v1671
        %v2119 = vsel %vm560, %v1092, %v1673
        %v2120 = vsel %vm560, %v1093, %v1675
        %v2121 = vsel %vm560, %v1094, %v1677
        %v2122 = vsel %vm560, %v1095, %v1679
        %v2123 = vsel %vm560, %v1096, %v1681
        %v2124 = vsel %vm560, %v1097, %v1683
        %v2125 = vsel %vm560, %v1098, %v1685
        %v2126 = vsel %vm560, %v1099, %v1687
        %v2127 = vsel %vm560, %v1100, %v1689
        %v2128 = vsel %vm560, %v1101, %v1691
        %v2129 = vsel %vm560, %v1102, %v1693
        %v2130 = vsel %vm560, %v1103, %v1695
        %v2131 = vsel %vm560, %v1104, %v1697
        %v2132 = vsel %vm560, %v1105, %v1699
        %v2133 = vsel %vm560, %v1106, %v1701
        %v2134 = vsel %vm560, %v1107, %v1703
        %v2135 = vsel %vm560, %v1108, %v1705
        %v2136 = vsel %vm560, %v1109, %v1707
        %v2137 = vsel %vm560, %v1110, %v1709
        %v2138 = vsel %vm560, %v1111, %v1711
        %v2139 = vsel %vm560, %v1112, %v1713
        %v2140 = vsel %vm560, %v1113, %v1715
        %v2141 = vsel %vm560, %v1114, %v1717
        %v2142 = vsel %vm560, %v1115, %v1719
        %v2143 = vsel %vm560, %v1116, %v1721
        %v2144 = vsel %vm560, %v1117, %v1723
        %v2145 = vsel %vm560, %v1118, %v1725
        %v2146 = vsel %vm560, %v1119, %v1727
        %v2147 = vsel %vm560, %v1120, %v1729
        %v2148 = vsel %vm2050, %v2116, %v1795
        %v2149 = vsel %vm2050, %v2117, %v1797
        %v2150 = vsel %vm2050, %v2118, %v1799
        %v2151 = vsel %vm2050, %v2119, %v1801
        %v2152 = vsel %vm2050, %v2120, %v1803
        %v2153 = vsel %vm2050, %v2121, %v1805
        %v2154 = vsel %vm2050, %v2122, %v1807
        %v2155 = vsel %vm2050, %v2123, %v1809
        %v2156 = vsel %vm2050, %v2124, %v1811
        %v2157 = vsel %vm2050, %v2125, %v1813
        %v2158 = vsel %vm2050, %v2126, %v1815
        %v2159 = vsel %vm2050, %v2127, %v1817
        %v2160 = vsel %vm2050, %v2128, %v1819
        %v2161 = vsel %vm2050, %v2129, %v1821
        %v2162 = vsel %vm2050, %v2130, %v1823
        %v2163 = vsel %vm2050, %v2131, %v1825
        %v2164 = vsel %vm2050, %v2132, %v1827
        %v2165 = vsel %vm2050, %v2133, %v1829
        %v2166 = vsel %vm2050, %v2134, %v1831
        %v2167 = vsel %vm2050, %v2135, %v1833
        %v2168 = vsel %vm2050, %v2136, %v1835
        %v2169 = vsel %vm2050, %v2137, %v1837
        %v2170 = vsel %vm2050, %v2138, %v1839
        %v2171 = vsel %vm2050, %v2139, %v1841
        %v2172 = vsel %vm2050, %v2140, %v1843
        %v2173 = vsel %vm2050, %v2141, %v1845
        %v2174 = vsel %vm2050, %v2142, %v1847
        %v2175 = vsel %vm2050, %v2143, %v1849
        %v2176 = vsel %vm2050, %v2144, %v1851
        %v2177 = vsel %vm2050, %v2145, %v1853
        %v2178 = vsel %vm2050, %v2146, %v1855
        %v2179 = vsel %vm2050, %v2147, %v1857
        %v2180 = vsel %vm2083, %v2148, %v1923
        %v2181 = vsel %vm2083, %v2149, %v1925
        %v2182 = vsel %vm2083, %v2150, %v1927
        %v2183 = vsel %vm2083, %v2151, %v1929
        %v2184 = vsel %vm2083, %v2152, %v1931
        %v2185 = vsel %vm2083, %v2153, %v1933
        %v2186 = vsel %vm2083, %v2154, %v1935
        %v2187 = vsel %vm2083, %v2155, %v1937
        %v2188 = vsel %vm2083, %v2156, %v1939
        %v2189 = vsel %vm2083, %v2157, %v1941
        %v2190 = vsel %vm2083, %v2158, %v1943
        %v2191 = vsel %vm2083, %v2159, %v1945
        %v2192 = vsel %vm2083, %v2160, %v1947
        %v2193 = vsel %vm2083, %v2161, %v1949
        %v2194 = vsel %vm2083, %v2162, %v1951
        %v2195 = vsel %vm2083, %v2163, %v1953
        %v2196 = vsel %vm2083, %v2164, %v1955
        %v2197 = vsel %vm2083, %v2165, %v1957
        %v2198 = vsel %vm2083, %v2166, %v1959
        %v2199 = vsel %vm2083, %v2167, %v1961
        %v2200 = vsel %vm2083, %v2168, %v1963
        %v2201 = vsel %vm2083, %v2169, %v1965
        %v2202 = vsel %vm2083, %v2170, %v1967
        %v2203 = vsel %vm2083, %v2171, %v1969
        %v2204 = vsel %vm2083, %v2172, %v1971
        %v2205 = vsel %vm2083, %v2173, %v1973
        %v2206 = vsel %vm2083, %v2174, %v1975
        %v2207 = vsel %vm2083, %v2175, %v1977
        %v2208 = vsel %vm2083, %v2176, %v1979
        %v2209 = vsel %vm2083, %v2177, %v1981
        %v2210 = vsel %vm2083, %v2178, %v1983
        %v2211 = vsel %vm2083, %v2179, %v1985
        %v2212 = vld [vmem:[%s5] sm:$0xff]
        %v2213 = vld [vmem:[%s5 + $0x8] sm:$0xff]
        %v2214 = vld [vmem:[%s5 + $0x10] sm:$0xff]
        %v2215 = vld [vmem:[%s5 + $0x18] sm:$0xff]
        %v2216 = vld [vmem:[%s5 + $0x20] sm:$0xff]
        %v2217 = vld [vmem:[%s5 + $0x28] sm:$0xff]
        %v2218 = vld [vmem:[%s5 + $0x30] sm:$0xff]
        %v2219 = vld [vmem:[%s5 + $0x38] sm:$0xff]
        %v2220 = vld [vmem:[%s5 + $0x40] sm:$0xff]
        %v2221 = vld [vmem:[%s5 + $0x48] sm:$0xff]
        %v2222 = vld [vmem:[%s5 + $0x50] sm:$0xff]
        %v2223 = vld [vmem:[%s5 + $0x58] sm:$0xff]
        %v2224 = vld [vmem:[%s5 + $0x60] sm:$0xff]
        %v2225 = vld [vmem:[%s5 + $0x68] sm:$0xff]
        %v2226 = vld [vmem:[%s5 + $0x70] sm:$0xff]
        %v2227 = vld [vmem:[%s5 + $0x78] sm:$0xff]
        %v2228 = vld [vmem:[%s5 + $0x80] sm:$0xff]
        %v2229 = vld [vmem:[%s5 + $0x88] sm:$0xff]
        %v2230 = vld [vmem:[%s5 + $0x90] sm:$0xff]
        %v2231 = vld [vmem:[%s5 + $0x98] sm:$0xff]
        %v2232 = vld [vmem:[%s5 + $0xa0] sm:$0xff]
        %v2233 = vld [vmem:[%s5 + $0xa8] sm:$0xff]
        %v2234 = vld [vmem:[%s5 + $0xb0] sm:$0xff]
        %v2235 = vld [vmem:[%s5 + $0xb8] sm:$0xff]
        %v2236 = vld [vmem:[%s5 + $0xc0] sm:$0xff]
        %v2237 = vld [vmem:[%s5 + $0xc8] sm:$0xff]
        %v2238 = vld [vmem:[%s5 + $0xd0] sm:$0xff]
        %v2239 = vld [vmem:[%s5 + $0xd8] sm:$0xff]
        %v2240 = vld [vmem:[%s5 + $0xe0] sm:$0xff]
        %v2241 = vld [vmem:[%s5 + $0xe8] sm:$0xff]
        %v2242 = vld [vmem:[%s5 + $0xf0] sm:$0xff]
        %v2243 = vld [vmem:[%s5 + $0xf8] sm:$0xff]
        %v2244 = vld [vmem:[%s5 + $0x100] sm:$0xff]
        %v2245 = vld [vmem:[%s5 + $0x108] sm:$0xff]
        %v2246 = vld [vmem:[%s5 + $0x110] sm:$0xff]
        %v2247 = vld [vmem:[%s5 + $0x118] sm:$0xff]
        %v2248 = vld [vmem:[%s6] sm:$0x1]
        %v2250 = vperm.slane %v2248, 0
        %v2253 = vsel %vm560, %v1218, 0
        %v2256 = vsel %vm560, %v1219, 0
        %v2259 = vsel %vm560, %v1220, 0
        %v2262 = vsel %vm560, %v1221, 0
        %v2265 = vsel %vm560, %v1222, 0
        %v2268 = vsel %vm560, %v1223, 0
        %v2271 = vsel %vm560, %v1224, 0
        %v2274 = vsel %vm560, %v1225, 0
        %v2277 = vsel %vm560, %v1226, 0
        %v2280 = vsel %vm560, %v1227, 0
        %v2283 = vsel %vm560, %v1228, 0
        %v2286 = vsel %vm560, %v1229, 0
        %v2289 = vsel %vm560, %v1230, 0
        %v2292 = vsel %vm560, %v1231, 0
        %v2295 = vsel %vm560, %v1232, 0
        %v2298 = vsel %vm560, %v1233, 0
        %v2301 = vsel %vm560, %v1234, 0
        %v2304 = vsel %vm560, %v1235, 0
        %v2307 = vsel %vm560, %v1236, 0
        %v2310 = vsel %vm560, %v1237, 0
        %v2313 = vsel %vm560, %v1238, 0
        %v2316 = vsel %vm560, %v1239, 0
        %v2319 = vsel %vm560, %v1240, 0
        %v2322 = vsel %vm560, %v1241, 0
        %v2325 = vsel %vm560, %v1242, 0
        %v2328 = vsel %vm560, %v1243, 0
        %v2331 = vsel %vm560, %v1244, 0
        %v2334 = vsel %vm560, %v1245, 0
        %v2337 = vsel %vm560, %v1246, 0
        %v2340 = vsel %vm560, %v1247, 0
        %v2343 = vsel %vm560, %v1248, 0
        %v2346 = vsel %vm560, %v1249, 0
        %2348 = vmatpush.msra.mxu0 %v2227
        %2349 = vmatpush.msra.mxu0 %v2226
        %2350 = vmatpush.msra.mxu0 %v2225
        %2351 = vmatpush.msra.mxu0 %v2224
        %2352 = vmatpush.msra.mxu0 %v2223
        %2353 = vmatpush.msra.mxu0 %v2222
        %2354 = vmatpush.msra.mxu0 %v2221
        %2355 = vmatpush.msra.mxu0 %v2220
        %2356 = vmatpush.msra.mxu0 %v2219
        %2357 = vmatpush.msra.mxu0 %v2218
        %2358 = vmatpush.msra.mxu0 %v2217
        %2359 = vmatpush.msra.mxu0 %v2216
        %2360 = vmatpush.msra.mxu0 %v2215
        %2361 = vmatpush.msra.mxu0 %v2214
        %2362 = vmatpush.msra.mxu0 %v2213
        %2363 = vmatpush.msra.mxu0 %v2212
        %2364 = vmatmul.f32.gmra.mxu0 %v2084
        %v2365 = vpop.f32.mrf.mxu0
        %v2366 = vadd.f32 %v2250, %v2365
        %2367 = vmatmul.f32.gmra.mxu0 %v2085
        %v2368 = vpop.f32.mrf.mxu0
        %v2369 = vadd.f32 %v2250, %v2368
        %2370 = vmatmul.f32.gmra.mxu0 %v2086
        %v2371 = vpop.f32.mrf.mxu0
        %v2372 = vadd.f32 %v2250, %v2371
        %2373 = vmatmul.f32.gmra.mxu0 %v2087
        %v2374 = vpop.f32.mrf.mxu0
        %v2375 = vadd.f32 %v2250, %v2374
        %2376 = vmatmul.f32.gmra.mxu0 %v2088
        %v2377 = vpop.f32.mrf.mxu0
        %v2378 = vadd.f32 %v2250, %v2377
        %2379 = vmatmul.f32.gmra.mxu0 %v2089
        %v2380 = vpop.f32.mrf.mxu0
        %v2381 = vadd.f32 %v2250, %v2380
        %2382 = vmatmul.f32.gmra.mxu0 %v2090
        %v2383 = vpop.f32.mrf.mxu0
        %v2384 = vadd.f32 %v2250, %v2383
        %2385 = vmatmul.f32.gmra.mxu0 %v2091
        %v2386 = vpop.f32.mrf.mxu0
        %v2387 = vadd.f32 %v2250, %v2386
        %2388 = vmatmul.f32.gmra.mxu0 %v2092
        %v2389 = vpop.f32.mrf.mxu0
        %v2390 = vadd.f32 %v2250, %v2389
        %2391 = vmatmul.f32.gmra.mxu0 %v2093
        %v2392 = vpop.f32.mrf.mxu0
        %v2393 = vadd.f32 %v2250, %v2392
        %2394 = vmatmul.f32.gmra.mxu0 %v2094
        %v2395 = vpop.f32.mrf.mxu0
        %v2396 = vadd.f32 %v2250, %v2395
        %2397 = vmatmul.f32.gmra.mxu0 %v2095
        %v2398 = vpop.f32.mrf.mxu0
        %v2399 = vadd.f32 %v2250, %v2398
        %2400 = vmatmul.f32.gmra.mxu0 %v2096
        %v2401 = vpop.f32.mrf.mxu0
        %v2402 = vadd.f32 %v2250, %v2401
        %2403 = vmatmul.f32.gmra.mxu0 %v2097
        %v2404 = vpop.f32.mrf.mxu0
        %v2405 = vadd.f32 %v2250, %v2404
        %2406 = vmatmul.f32.gmra.mxu0 %v2098
        %v2407 = vpop.f32.mrf.mxu0
        %v2408 = vadd.f32 %v2250, %v2407
        %2409 = vmatmul.f32.gmra.mxu0 %v2099
        %v2410 = vpop.f32.mrf.mxu0
        %v2411 = vadd.f32 %v2250, %v2410
        %2412 = vmatmul.f32.gmra.mxu0 %v2100
        %v2413 = vpop.f32.mrf.mxu0
        %v2414 = vadd.f32 %v2250, %v2413
        %2415 = vmatmul.f32.gmra.mxu0 %v2101
        %v2416 = vpop.f32.mrf.mxu0
        %v2417 = vadd.f32 %v2250, %v2416
        %2418 = vmatmul.f32.gmra.mxu0 %v2102
        %v2419 = vpop.f32.mrf.mxu0
        %v2420 = vadd.f32 %v2250, %v2419
        %2421 = vmatmul.f32.gmra.mxu0 %v2103
        %v2422 = vpop.f32.mrf.mxu0
        %v2423 = vadd.f32 %v2250, %v2422
        %2424 = vmatmul.f32.gmra.mxu0 %v2104
        %v2425 = vpop.f32.mrf.mxu0
        %v2426 = vadd.f32 %v2250, %v2425
        %2427 = vmatmul.f32.gmra.mxu0 %v2105
        %v2428 = vpop.f32.mrf.mxu0
        %v2429 = vadd.f32 %v2250, %v2428
        %2430 = vmatmul.f32.gmra.mxu0 %v2106
        %v2431 = vpop.f32.mrf.mxu0
        %v2432 = vadd.f32 %v2250, %v2431
        %2433 = vmatmul.f32.gmra.mxu0 %v2107
        %v2434 = vpop.f32.mrf.mxu0
        %v2435 = vadd.f32 %v2250, %v2434
        %2436 = vmatmul.f32.gmra.mxu0 %v2108
        %v2437 = vpop.f32.mrf.mxu0
        %v2438 = vadd.f32 %v2250, %v2437
        %2439 = vmatmul.f32.gmra.mxu0 %v2109
        %v2440 = vpop.f32.mrf.mxu0
        %v2441 = vadd.f32 %v2250, %v2440
        %2442 = vmatmul.f32.gmra.mxu0 %v2110
        %v2443 = vpop.f32.mrf.mxu0
        %v2444 = vadd.f32 %v2250, %v2443
        %2445 = vmatmul.f32.gmra.mxu0 %v2111
        %v2446 = vpop.f32.mrf.mxu0
        %v2447 = vadd.f32 %v2250, %v2446
        %2448 = vmatmul.f32.gmra.mxu0 %v2112
        %v2449 = vpop.f32.mrf.mxu0
        %v2450 = vadd.f32 %v2250, %v2449
        %2451 = vmatmul.f32.gmra.mxu0 %v2113
        %v2452 = vpop.f32.mrf.mxu0
        %v2453 = vadd.f32 %v2250, %v2452
        %2454 = vmatmul.f32.gmra.mxu0 %v2114
        %v2455 = vpop.f32.mrf.mxu0
        %v2456 = vadd.f32 %v2250, %v2455
        %2457 = vmatmul.f32.gmra.mxu0 %v2115
        %v2458 = vpop.f32.mrf.mxu0
        %v2459 = vadd.f32 %v2250, %v2458
        %2460 = vdwg.mxu0
        %2461 = vmatpush.msra.mxu0 %v2243
        %2462 = vmatpush.msra.mxu0 %v2242
        %2463 = vmatpush.msra.mxu0 %v2241
        %2464 = vmatpush.msra.mxu0 %v2240
        %2465 = vmatpush.msra.mxu0 %v2239
        %2466 = vmatpush.msra.mxu0 %v2238
        %2467 = vmatpush.msra.mxu0 %v2237
        %2468 = vmatpush.msra.mxu0 %v2236
        %2469 = vmatpush.msra.mxu0 %v2235
        %2470 = vmatpush.msra.mxu0 %v2234
        %2471 = vmatpush.msra.mxu0 %v2233
        %2472 = vmatpush.msra.mxu0 %v2232
        %2473 = vmatpush.msra.mxu0 %v2231
        %2474 = vmatpush.msra.mxu0 %v2230
        %2475 = vmatpush.msra.mxu0 %v2229
        %2476 = vmatpush.msra.mxu0 %v2228
        %2477 = vmatmul.f32.gmra.mxu0 %v2180
        %v2478 = vpop.f32.mrf.mxu0
        %v2479 = vadd.f32 %v2366, %v2478
        %2480 = vmatmul.f32.gmra.mxu0 %v2181
        %v2481 = vpop.f32.mrf.mxu0
        %v2482 = vadd.f32 %v2369, %v2481
        %2483 = vmatmul.f32.gmra.mxu0 %v2182
        %v2484 = vpop.f32.mrf.mxu0
        %v2485 = vadd.f32 %v2372, %v2484
        %2486 = vmatmul.f32.gmra.mxu0 %v2183
        %v2487 = vpop.f32.mrf.mxu0
        %v2488 = vadd.f32 %v2375, %v2487
        %2489 = vmatmul.f32.gmra.mxu0 %v2184
        %v2490 = vpop.f32.mrf.mxu0
        %v2491 = vadd.f32 %v2378, %v2490
        %2492 = vmatmul.f32.gmra.mxu0 %v2185
        %v2493 = vpop.f32.mrf.mxu0
        %v2494 = vadd.f32 %v2381, %v2493
        %2495 = vmatmul.f32.gmra.mxu0 %v2186
        %v2496 = vpop.f32.mrf.mxu0
        %v2497 = vadd.f32 %v2384, %v2496
        %2498 = vmatmul.f32.gmra.mxu0 %v2187
        %v2499 = vpop.f32.mrf.mxu0
        %v2500 = vadd.f32 %v2387, %v2499
        %2501 = vmatmul.f32.gmra.mxu0 %v2188
        %v2502 = vpop.f32.mrf.mxu0
        %v2503 = vadd.f32 %v2390, %v2502
        %2504 = vmatmul.f32.gmra.mxu0 %v2189
        %v2505 = vpop.f32.mrf.mxu0
        %v2506 = vadd.f32 %v2393, %v2505
        %2507 = vmatmul.f32.gmra.mxu0 %v2190
        %v2508 = vpop.f32.mrf.mxu0
        %v2509 = vadd.f32 %v2396, %v2508
        %2510 = vmatmul.f32.gmra.mxu0 %v2191
        %v2511 = vpop.f32.mrf.mxu0
        %v2512 = vadd.f32 %v2399, %v2511
        %2513 = vmatmul.f32.gmra.mxu0 %v2192
        %v2514 = vpop.f32.mrf.mxu0
        %v2515 = vadd.f32 %v2402, %v2514
        %2516 = vmatmul.f32.gmra.mxu0 %v2193
        %v2517 = vpop.f32.mrf.mxu0
        %v2518 = vadd.f32 %v2405, %v2517
        %2519 = vmatmul.f32.gmra.mxu0 %v2194
        %v2520 = vpop.f32.mrf.mxu0
        %v2521 = vadd.f32 %v2408, %v2520
        %2522 = vmatmul.f32.gmra.mxu0 %v2195
        %v2523 = vpop.f32.mrf.mxu0
        %v2524 = vadd.f32 %v2411, %v2523
        %2525 = vmatmul.f32.gmra.mxu0 %v2196
        %v2526 = vpop.f32.mrf.mxu0
        %v2527 = vadd.f32 %v2414, %v2526
        %2528 = vmatmul.f32.gmra.mxu0 %v2197
        %v2529 = vpop.f32.mrf.mxu0
        %v2530 = vadd.f32 %v2417, %v2529
        %2531 = vmatmul.f32.gmra.mxu0 %v2198
        %v2532 = vpop.f32.mrf.mxu0
        %v2533 = vadd.f32 %v2420, %v2532
        %2534 = vmatmul.f32.gmra.mxu0 %v2199
        %v2535 = vpop.f32.mrf.mxu0
        %v2536 = vadd.f32 %v2423, %v2535
        %2537 = vmatmul.f32.gmra.mxu0 %v2200
        %v2538 = vpop.f32.mrf.mxu0
        %v2539 = vadd.f32 %v2426, %v2538
        %2540 = vmatmul.f32.gmra.mxu0 %v2201
        %v2541 = vpop.f32.mrf.mxu0
        %v2542 = vadd.f32 %v2429, %v2541
        %2543 = vmatmul.f32.gmra.mxu0 %v2202
        %v2544 = vpop.f32.mrf.mxu0
        %v2545 = vadd.f32 %v2432, %v2544
        %2546 = vmatmul.f32.gmra.mxu0 %v2203
        %v2547 = vpop.f32.mrf.mxu0
        %v2548 = vadd.f32 %v2435, %v2547
        %2549 = vmatmul.f32.gmra.mxu0 %v2204
        %v2550 = vpop.f32.mrf.mxu0
        %v2551 = vadd.f32 %v2438, %v2550
        %2552 = vmatmul.f32.gmra.mxu0 %v2205
        %v2553 = vpop.f32.mrf.mxu0
        %v2554 = vadd.f32 %v2441, %v2553
        %2555 = vmatmul.f32.gmra.mxu0 %v2206
        %v2556 = vpop.f32.mrf.mxu0
        %v2557 = vadd.f32 %v2444, %v2556
        %2558 = vmatmul.f32.gmra.mxu0 %v2207
        %v2559 = vpop.f32.mrf.mxu0
        %v2560 = vadd.f32 %v2447, %v2559
        %2561 = vmatmul.f32.gmra.mxu0 %v2208
        %v2562 = vpop.f32.mrf.mxu0
        %v2563 = vadd.f32 %v2450, %v2562
        %2564 = vmatmul.f32.gmra.mxu0 %v2209
        %v2565 = vpop.f32.mrf.mxu0
        %v2566 = vadd.f32 %v2453, %v2565
        %2567 = vmatmul.f32.gmra.mxu0 %v2210
        %v2568 = vpop.f32.mrf.mxu0
        %v2569 = vadd.f32 %v2456, %v2568
        %2570 = vmatmul.f32.gmra.mxu0 %v2211
        %v2571 = vpop.f32.mrf.mxu0
        %v2572 = vadd.f32 %v2459, %v2571
        %2573 = vdwg.mxu0
        %2574 = vmatpush.msra.mxu0 0.0
        %2575 = vmatpush.msra.mxu0 0.0
        %2576 = vmatpush.msra.mxu0 0.0
        %2577 = vmatpush.msra.mxu0 0.0
        %2578 = vmatpush.msra.mxu0 0.0
        %2579 = vmatpush.msra.mxu0 0.0
        %2580 = vmatpush.msra.mxu0 0.0
        %2581 = vmatpush.msra.mxu0 0.0
        %2582 = vmatpush.msra.mxu0 0.0
        %2583 = vmatpush.msra.mxu0 0.0
        %2584 = vmatpush.msra.mxu0 0.0
        %2585 = vmatpush.msra.mxu0 0.0
        %2586 = vmatpush.msra.mxu0 %v2247
        %2587 = vmatpush.msra.mxu0 %v2246
        %2588 = vmatpush.msra.mxu0 %v2245
        %2589 = vmatpush.msra.mxu0 %v2244
        %2590 = vmatmul.f32.gmra.mxu0 %v2253
        %v2591 = vpop.f32.mrf.mxu0
        %v2592 = vadd.f32 %v2479, %v2591
        %2593 = vmatmul.f32.gmra.mxu0 %v2256
        %v2594 = vpop.f32.mrf.mxu0
        %v2595 = vadd.f32 %v2482, %v2594
        %2596 = vmatmul.f32.gmra.mxu0 %v2259
        %v2597 = vpop.f32.mrf.mxu0
        %v2598 = vadd.f32 %v2485, %v2597
        %2599 = vmatmul.f32.gmra.mxu0 %v2262
        %v2600 = vpop.f32.mrf.mxu0
        %v2601 = vadd.f32 %v2488, %v2600
        %2602 = vmatmul.f32.gmra.mxu0 %v2265
        %v2603 = vpop.f32.mrf.mxu0
        %v2604 = vadd.f32 %v2491, %v2603
        %2605 = vmatmul.f32.gmra.mxu0 %v2268
        %v2606 = vpop.f32.mrf.mxu0
        %v2607 = vadd.f32 %v2494, %v2606
        %2608 = vmatmul.f32.gmra.mxu0 %v2271
        %v2609 = vpop.f32.mrf.mxu0
        %v2610 = vadd.f32 %v2497, %v2609
        %2611 = vmatmul.f32.gmra.mxu0 %v2274
        %v2612 = vpop.f32.mrf.mxu0
        %v2613 = vadd.f32 %v2500, %v2612
        %2614 = vmatmul.f32.gmra.mxu0 %v2277
        %v2615 = vpop.f32.mrf.mxu0
        %v2616 = vadd.f32 %v2503, %v2615
        %2617 = vmatmul.f32.gmra.mxu0 %v2280
        %v2618 = vpop.f32.mrf.mxu0
        %v2619 = vadd.f32 %v2506, %v2618
        %2620 = vmatmul.f32.gmra.mxu0 %v2283
        %v2621 = vpop.f32.mrf.mxu0
        %v2622 = vadd.f32 %v2509, %v2621
        %2623 = vmatmul.f32.gmra.mxu0 %v2286
        %v2624 = vpop.f32.mrf.mxu0
        %v2625 = vadd.f32 %v2512, %v2624
        %2626 = vmatmul.f32.gmra.mxu0 %v2289
        %v2627 = vpop.f32.mrf.mxu0
        %v2628 = vadd.f32 %v2515, %v2627
        %2629 = vmatmul.f32.gmra.mxu0 %v2292
        %v2630 = vpop.f32.mrf.mxu0
        %v2631 = vadd.f32 %v2518, %v2630
        %2632 = vmatmul.f32.gmra.mxu0 %v2295
        %v2633 = vpop.f32.mrf.mxu0
        %v2634 = vadd.f32 %v2521, %v2633
        %2635 = vmatmul.f32.gmra.mxu0 %v2298
        %v2636 = vpop.f32.mrf.mxu0
        %v2637 = vadd.f32 %v2524, %v2636
        %2638 = vmatmul.f32.gmra.mxu0 %v2301
        %v2639 = vpop.f32.mrf.mxu0
        %v2640 = vadd.f32 %v2527, %v2639
        %2641 = vmatmul.f32.gmra.mxu0 %v2304
        %v2642 = vpop.f32.mrf.mxu0
        %v2643 = vadd.f32 %v2530, %v2642
        %2644 = vmatmul.f32.gmra.mxu0 %v2307
        %v2645 = vpop.f32.mrf.mxu0
        %v2646 = vadd.f32 %v2533, %v2645
        %2647 = vmatmul.f32.gmra.mxu0 %v2310
        %v2648 = vpop.f32.mrf.mxu0
        %v2649 = vadd.f32 %v2536, %v2648
        %2650 = vmatmul.f32.gmra.mxu0 %v2313
        %v2651 = vpop.f32.mrf.mxu0
        %v2652 = vadd.f32 %v2539, %v2651
        %2653 = vmatmul.f32.gmra.mxu0 %v2316
        %v2654 = vpop.f32.mrf.mxu0
        %v2655 = vadd.f32 %v2542, %v2654
        %2656 = vmatmul.f32.gmra.mxu0 %v2319
        %v2657 = vpop.f32.mrf.mxu0
        %v2658 = vadd.f32 %v2545, %v2657
        %2659 = vmatmul.f32.gmra.mxu0 %v2322
        %v2660 = vpop.f32.mrf.mxu0
        %v2661 = vadd.f32 %v2548, %v2660
        %2662 = vmatmul.f32.gmra.mxu0 %v2325
        %v2663 = vpop.f32.mrf.mxu0
        %v2664 = vadd.f32 %v2551, %v2663
        %2665 = vmatmul.f32.gmra.mxu0 %v2328
        %v2666 = vpop.f32.mrf.mxu0
        %v2667 = vadd.f32 %v2554, %v2666
        %2668 = vmatmul.f32.gmra.mxu0 %v2331
        %v2669 = vpop.f32.mrf.mxu0
        %v2670 = vadd.f32 %v2557, %v2669
        %2671 = vmatmul.f32.gmra.mxu0 %v2334
        %v2672 = vpop.f32.mrf.mxu0
        %v2673 = vadd.f32 %v2560, %v2672
        %2674 = vmatmul.f32.gmra.mxu0 %v2337
        %v2675 = vpop.f32.mrf.mxu0
        %v2676 = vadd.f32 %v2563, %v2675
        %2677 = vmatmul.f32.gmra.mxu0 %v2340
        %v2678 = vpop.f32.mrf.mxu0
        %v2679 = vadd.f32 %v2566, %v2678
        %2680 = vmatmul.f32.gmra.mxu0 %v2343
        %v2681 = vpop.f32.mrf.mxu0
        %v2682 = vadd.f32 %v2569, %v2681
        %2683 = vmatmul.f32.gmra.mxu0 %v2346
        %v2684 = vpop.f32.mrf.mxu0
        %v2685 = vadd.f32 %v2572, %v2684
        %2686 = vdwg.mxu0
        %v2687 = vadd.f32 %v711, %v2592
        %v2688 = vadd.f32 %v712, %v2595
        %v2689 = vadd.f32 %v713, %v2598
        %v2690 = vadd.f32 %v714, %v2601
        %v2691 = vadd.f32 %v715, %v2604
        %v2692 = vadd.f32 %v716, %v2607
        %v2693 = vadd.f32 %v717, %v2610
        %v2694 = vadd.f32 %v718, %v2613
        %v2695 = vadd.f32 %v719, %v2616
        %v2696 = vadd.f32 %v720, %v2619
        %v2697 = vadd.f32 %v721, %v2622
        %v2698 = vadd.f32 %v722, %v2625
        %v2699 = vadd.f32 %v723, %v2628
        %v2700 = vadd.f32 %v724, %v2631
        %v2701 = vadd.f32 %v725, %v2634
        %v2702 = vadd.f32 %v726, %v2637
        %v2703 = vadd.f32 %v727, %v2640
        %v2704 = vadd.f32 %v728, %v2643
        %v2705 = vadd.f32 %v729, %v2646
        %v2706 = vadd.f32 %v730, %v2649
        %v2707 = vadd.f32 %v731, %v2652
        %v2708 = vadd.f32 %v732, %v2655
        %v2709 = vadd.f32 %v733, %v2658
        %v2710 = vadd.f32 %v734, %v2661
        %v2711 = vadd.f32 %v735, %v2664
        %v2712 = vadd.f32 %v736, %v2667
        %v2713 = vadd.f32 %v737, %v2670
        %v2714 = vadd.f32 %v738, %v2673
        %v2715 = vadd.f32 %v739, %v2676
        %v2716 = vadd.f32 %v740, %v2679
        %v2717 = vadd.f32 %v741, %v2682
        %v2718 = vadd.f32 %v742, %v2685
        %v2719 = vmax.f32 %v2687, 0.0
        %v2720 = vmax.f32 %v2688, 0.0
        %v2721 = vmax.f32 %v2689, 0.0
        %v2722 = vmax.f32 %v2690, 0.0
        %v2723 = vmax.f32 %v2691, 0.0
        %v2724 = vmax.f32 %v2692, 0.0
        %v2725 = vmax.f32 %v2693, 0.0
        %v2726 = vmax.f32 %v2694, 0.0
        %v2727 = vmax.f32 %v2695, 0.0
        %v2728 = vmax.f32 %v2696, 0.0
        %v2729 = vmax.f32 %v2697, 0.0
        %v2730 = vmax.f32 %v2698, 0.0
        %v2731 = vmax.f32 %v2699, 0.0
        %v2732 = vmax.f32 %v2700, 0.0
        %v2733 = vmax.f32 %v2701, 0.0
        %v2734 = vmax.f32 %v2702, 0.0
        %v2735 = vmax.f32 %v2703, 0.0
        %v2736 = vmax.f32 %v2704, 0.0
        %v2737 = vmax.f32 %v2705, 0.0
        %v2738 = vmax.f32 %v2706, 0.0
        %v2739 = vmax.f32 %v2707, 0.0
        %v2740 = vmax.f32 %v2708, 0.0
        %v2741 = vmax.f32 %v2709, 0.0
        %v2742 = vmax.f32 %v2710, 0.0
        %v2743 = vmax.f32 %v2711, 0.0
        %v2744 = vmax.f32 %v2712, 0.0
        %v2745 = vmax.f32 %v2713, 0.0
        %v2746 = vmax.f32 %v2714, 0.0
        %v2747 = vmax.f32 %v2715, 0.0
        %v2748 = vmax.f32 %v2716, 0.0
        %v2749 = vmax.f32 %v2717, 0.0
        %v2750 = vmax.f32 %v2718, 0.0
        %2751 = vst.msk [vmem:[%s271] sm:$0xff] %vm560, %v2719
        %2752 = vst.msk [vmem:[%s271 + $0x8] sm:$0xff] %vm560, %v2720
        %2753 = vst.msk [vmem:[%s271 + $0x10] sm:$0xff] %vm560, %v2721
        %2754 = vst.msk [vmem:[%s271 + $0x18] sm:$0xff] %vm560, %v2722
        %2755 = vst.msk [vmem:[%s271 + $0x20] sm:$0xff] %vm560, %v2723
        %2756 = vst.msk [vmem:[%s271 + $0x28] sm:$0xff] %vm560, %v2724
        %2757 = vst.msk [vmem:[%s271 + $0x30] sm:$0xff] %vm560, %v2725
        %2758 = vst.msk [vmem:[%s271 + $0x38] sm:$0xff] %vm560, %v2726
        %2759 = vst.msk [vmem:[%s271 + $0x40] sm:$0xff] %vm560, %v2727
        %2760 = vst.msk [vmem:[%s271 + $0x48] sm:$0xff] %vm560, %v2728
        %2761 = vst.msk [vmem:[%s271 + $0x50] sm:$0xff] %vm560, %v2729
        %2762 = vst.msk [vmem:[%s271 + $0x58] sm:$0xff] %vm560, %v2730
        %2763 = vst.msk [vmem:[%s271 + $0x60] sm:$0xff] %vm560, %v2731
        %2764 = vst.msk [vmem:[%s271 + $0x68] sm:$0xff] %vm560, %v2732
        %2765 = vst.msk [vmem:[%s271 + $0x70] sm:$0xff] %vm560, %v2733
        %2766 = vst.msk [vmem:[%s271 + $0x78] sm:$0xff] %vm560, %v2734
        %2767 = vst.msk [vmem:[%s271 + $0x80] sm:$0xff] %vm560, %v2735
        %2768 = vst.msk [vmem:[%s271 + $0x88] sm:$0xff] %vm560, %v2736
        %2769 = vst.msk [vmem:[%s271 + $0x90] sm:$0xff] %vm560, %v2737
        %2770 = vst.msk [vmem:[%s271 + $0x98] sm:$0xff] %vm560, %v2738
        %2771 = vst.msk [vmem:[%s271 + $0xa0] sm:$0xff] %vm560, %v2739
        %2772 = vst.msk [vmem:[%s271 + $0xa8] sm:$0xff] %vm560, %v2740
        %2773 = vst.msk [vmem:[%s271 + $0xb0] sm:$0xff] %vm560, %v2741
        %2774 = vst.msk [vmem:[%s271 + $0xb8] sm:$0xff] %vm560, %v2742
        %2775 = vst.msk [vmem:[%s271 + $0xc0] sm:$0xff] %vm560, %v2743
        %2776 = vst.msk [vmem:[%s271 + $0xc8] sm:$0xff] %vm560, %v2744
        %2777 = vst.msk [vmem:[%s271 + $0xd0] sm:$0xff] %vm560, %v2745
        %2778 = vst.msk [vmem:[%s271 + $0xd8] sm:$0xff] %vm560, %v2746
        %2779 = vst.msk [vmem:[%s271 + $0xe0] sm:$0xff] %vm560, %v2747
        %2780 = vst.msk [vmem:[%s271 + $0xe8] sm:$0xff] %vm560, %v2748
        %2781 = vst.msk [vmem:[%s271 + $0xf0] sm:$0xff] %vm560, %v2749
        %2782 = vst.msk [vmem:[%s271 + $0xf8] sm:$0xff] %vm560, %v2750
        %s2783 = sand.u32 %s181, 1
        %s2784 = scalar_lea.sflag [#allocation4], %s2783
        %s2785 = sand.u32 %s181, 1
        %s2786 = smul.addr %s2785, 256
        %s2787 = scalar_lea.vmem [#allocation3], %s2786
        // Predicated region
        $region49: #{tpu_custom_call.1} parent=47 // pred_check
          %p2788 = pneg %p191
        $region50: #{tpu_custom_call.1} parent=47 // pred_check_branch
          %2790 = sbr.rel (%p2788) target = $region52
        $region51: #{tpu_custom_call.1} parent=47 // pred_region
          %2792 = vsyncadd %s2784, 0
          %s2793 = smul.addr %s21, 32
          %s2794 = smul.addr %s2793, 8
          %s2795 = scalar_lea.hbm %s7, %s2794
          %s2796 = sshll.u32 %s2787, 4
          %s2797 = int_to_ptr.vmem [resolvable:$true] %s2796
          %s2798 = sshll.u32 %s2795, 4
          %s2799 = int_to_ptr.hbm [resolvable:$true] %s2798
          %2804 = dma.vmem_to_hbm [thread:$0]  %s2797, 4096, %s2799, %s2784, 128, 128, 8
        $region52: #{tpu_custom_call.1} parent=47 // pred_fallthru
          _
      $region48: #{tpu_custom_call.1} parent=5 // pred_fallthru
        _
      %p2805 = scmp.le.s32.totalorder 2, %s16
      // Predicated region
      $region53: #{tpu_custom_call.1} parent=5 // pred_check
        %p2806 = pneg %p2805
      $region54: #{tpu_custom_call.1} parent=5 // pred_check_branch
        %2808 = sbr.rel (%p2806) target = $region56
      $region55: #{tpu_custom_call.1} parent=5 // pred_region
        %s2809 = ssub.s32 %s16, 2
        // Predicated region
        $region57: #{tpu_custom_call.1} parent=55 // pred_check
          %p2810 = pneg %p197
        $region58: #{tpu_custom_call.1} parent=55 // pred_check_branch
          %2812 = sbr.rel (%p2810) target = $region60
        $region59: #{tpu_custom_call.1} parent=55 // pred_region
          %s2813 = sand.u32 %s182, 1
          %s2814 = scalar_lea.sflag [#allocation4], %s2813
          %s2815 = sand.u32 %s182, 1
          %s2816 = smul.addr %s2815, 256
          %s2817 = scalar_lea.vmem [#allocation3], %s2816
          %2819 = dma.done %s2814, 4096
        $region60: #{tpu_custom_call.1} parent=55 // pred_fallthru
          _
      $region56: #{tpu_custom_call.1} parent=5 // pred_fallthru
        _
    $region6: #{tpu_custom_call.1} parent=1 // loop_footer
      %s20 = sadd.s32 1, %s16
    $region7: #{tpu_custom_call.1} parent=1 // loop_footer_branch
      %15 = sbr.rel target = $region3
    $region8: #{tpu_custom_call.1} parent=1 // loop_exit
      _
    %2820 = vsyncpa [#allocation4], 1
    %s2821 = scalar_lea.sflag [#allocation4], 1
    %2822 = vsyncpa %s2821, 1

</llo_original>
